<compile_context>
chip_gen: v7x
topology: tpu7x:2x2x1
jax: 0.10.0
libtpu: 0.0.40
codegen_flags: <defaults>
</compile_context>

<pallas_src>
import jax
import jax.numpy as jnp
from jax.experimental import pallas as pl
from jax.experimental.pallas import tpu as pltpu


# Per-layer activation pattern of the fused MLP run inside the kernel:
#   data branch : Linear+softplus, Linear+softplus, Linear            (no act on last)
#   shared trunk: Linear+softplus, Linear+softplus, Linear+softplus, Linear (no act on last)
_ACTS = (True, True, False, True, True, True, False)
_NUM_LAYERS = len(_ACTS)


def _softplus(x):
    # Numerically stable softplus; matches torch.nn.functional.softplus(beta=1, threshold=20)
    # to within float32 precision (for x > 20, log1p(exp(-x)) is far below 1 ulp of x).
    return jnp.maximum(x, 0.0) + jnp.log1p(jnp.exp(-jnp.abs(x)))


# ----------------------------- Pallas kernel --------------------------------

def _mlp_kernel(y_ref, w_ref, b_ref, out_ref):
    """y_ref: (TILE_B, PAD); w_ref: (7, PAD, PAD); b_ref: (7, 1, PAD); out_ref: (TILE_B, PAD)."""
    x = y_ref[...]
    for k, act in enumerate(_ACTS):  # static unroll: 7 MXU dots, all lane-dense
        x = jnp.dot(x, w_ref[k], preferred_element_type=jnp.float32) + b_ref[k]
        if act:
            x = _softplus(x)
    out_ref[...] = x.astype(out_ref.dtype)


def _round_up(x, m):
    return -(-x // m) * m


# ------------------------------ JAX wrapper ----------------------------------

@jax.jit
def neuralnet_forward(t, y, ctx, params):
    """Pallas implementation of NeuralNet.forward(t, y, ctx).

    t is unused (as in the PyTorch module). y: (B, data_size), ctx: (context_size,).
    params: flat list [W0, b0, ..., W9, b9]; weights stored (in, out), biases (1, out).
    """
    del t
    (cw0, cb0, cw1, cb1, cw2, cb2,
     dw0, db0, dw1, db1, dw2, db2,
     sw0, sb0, sw1, sb1, sw2, sb2, sw3, sb3) = [p.astype(jnp.float32) for p in params]

    B, data_size = y.shape
    H = dw0.shape[1]
    y = y.astype(jnp.float32)
    ctx2d = ctx.reshape(1, -1).astype(jnp.float32)

    # --- context branch + concat folded into an effective bias (plain XLA; M=1 work) ---
    c = _softplus(ctx2d @ cw0 + cb0)
    c = _softplus(c @ cw1 + cb1)
    c = c @ cw2 + cb2                      # (1, H) context features
    b_eff = c @ sw0[H:, :] + sb0           # (1, H) effective bias of trunk layer 0

    # --- pack the 7 batched layers into two zero-padded, lane-dense slabs ---
    PAD = max(128, _round_up(max(H, data_size), 128))
    weights = (dw0, dw1, dw2, sw0[:H, :], sw1, sw2, sw3)
    biases = (db0, db1, db2, b_eff, sb1, sb2, sb3)
    w_slab = jnp.stack(
        [jnp.pad(w, ((0, PAD - w.shape[0]), (0, PAD - w.shape[1]))) for w in weights])
    b_slab = jnp.stack(
        [jnp.pad(b, ((0, 0), (0, PAD - b.shape[1]))) for b in biases])[:, None, :]
    b_slab = b_slab.reshape(_NUM_LAYERS, 1, PAD)

    # --- batch tiling: one VMEM-resident block for small B, 128-row tiles otherwise ---
    if B <= 128:
        tile_b = _round_up(max(B, 8), 8)
    else:
        tile_b = 128
    b_pad = _round_up(B, tile_b)
    y_pad = jnp.pad(y, ((0, b_pad - B), (0, PAD - data_size)))
    grid = (b_pad // tile_b,)

    out_pad = pl.pallas_call(
        _mlp_kernel,
        out_shape=jax.ShapeDtypeStruct((b_pad, PAD), jnp.float32),
        grid=grid,
        in_specs=[
            pl.BlockSpec((tile_b, PAD), lambda i: (i, 0)),
            pl.BlockSpec((_NUM_LAYERS, PAD, PAD), lambda i: (0, 0, 0)),
            pl.BlockSpec((_NUM_LAYERS, 1, PAD), lambda i: (0, 0, 0)),
        ],
        out_specs=pl.BlockSpec((tile_b, PAD), lambda i: (i, 0)),
        compiler_params=pltpu.CompilerParams(
            dimension_semantics=("parallel",),      # shard row tiles across v7x's 2 TCs
            vmem_limit_bytes=16 * 1024 * 1024,
        ),
        cost_estimate=pl.CostEstimate(
            flops=2 * b_pad * PAD * PAD * _NUM_LAYERS,
            transcendentals=2 * b_pad * PAD * sum(_ACTS),
            bytes_accessed=4 * (2 * b_pad * PAD
                                + _NUM_LAYERS * PAD * PAD + _NUM_LAYERS * PAD),
        ),
    )(y_pad, w_slab, b_slab)

    return out_pad[:B, :data_size]


# ------------------------- init + pure-JAX reference -------------------------

def init_linear(key, in_dim, out_dim):
    """PyTorch-style uniform init U(-1/sqrt(in), 1/sqrt(in)); weight stored as (in, out)."""
    kw, kb = jax.random.split(key)
    bound = 1.0 / float(in_dim) ** 0.5
    w = jax.random.uniform(kw, (in_dim, out_dim), jnp.float32, -bound, bound)
    b = jax.random.uniform(kb, (1, out_dim), jnp.float32, -bound, bound)
    return w, b


def init_neuralnet_params(key, data_size, int_size, context_size):
    H = int_size
    dims = [
        (context_size, H), (H, H), (H, H),        # context branch
        (data_size, H), (H, H), (H, H),           # data branch
        (2 * H, H), (H, H), (H, H), (H, data_size),  # shared trunk
    ]
    keys = jax.random.split(key, len(dims))
    params = []
    for k, (i, o) in zip(keys, dims):
        w, b = init_linear(k, i, o)
        params.extend([w, b])
    return params  # flat list of 20 arrays


def neuralnet_forward_ref(t, y, ctx, params):
    """Pure-JAX reference following the original (unfolded) module structure."""
    del t
    sp = lambda x: jnp.where(x > 20.0, x, jnp.log1p(jnp.exp(jnp.minimum(x, 20.0))))
    lin = lambda x, w, b: x @ w + b
    p = params
    c = ctx.reshape(1, -1)
    c = sp(lin(c, p[0], p[1])); c = sp(lin(c, p[2], p[3])); c = lin(c, p[4], p[5])
    h = sp(lin(y, p[6], p[7])); h = sp(lin(h, p[8], p[9])); h = lin(h, p[10], p[11])
    h = jnp.concatenate([h, jnp.broadcast_to(c, h.shape)], axis=1)
    h = sp(lin(h, p[12], p[13])); h = sp(lin(h, p[14], p[15])); h = sp(lin(h, p[16], p[17]))
    h = lin(h, p[18], p[19])
    return h


if __name__ == "__main__":
    # Lotka-Volterra neural-ODE shapes; batch many state evaluations per call so the
    # kernel amortizes launch/DMA cost (2 grid blocks of 128 rows here).
    data_size = 4
    int_size = 32
    context_size = 2
    B = 256

    key = jax.random.PRNGKey(0)
    kp, ky, kc = jax.random.split(key, 3)

    params = init_neuralnet_params(kp, data_size, int_size, context_size)
    y = jax.random.normal(ky, (B, data_size), jnp.float32)
    ctx = jax.random.normal(kc, (context_size,), jnp.float32)
    t = jnp.float32(0.0)  # unused by the forward pass

    out = jax.block_until_ready(neuralnet_forward(t, y, ctx, params))
    ref = neuralnet_forward_ref(t, y, ctx, params)

    assert out.shape == (B, data_size)
    # Tolerance accommodates TPU default matmul-precision differences between the folded
    # (kernel) and unfolded (reference) lowerings of the same linear algebra; genuine
    # structural bugs (swapped concat halves, wrong layer/activation order) give O(1) error.
    err = float(jnp.max(jnp.abs(out - ref)))
    assert err < 1e-2, f"mismatch vs reference: max abs err {err}"

    print("KERNEL_OK")
</pallas_src>

<mosaic_0001>
module attributes {stable_mosaic.version = 11 : i64} {
  func.func @_mlp_kernel(%arg0: i32, %arg1: memref<128x128xf32, #tpu.memory_space<vmem>>, %arg2: memref<7x128x128xf32, #tpu.memory_space<vmem>>, %arg3: memref<7x1x128xf32, #tpu.memory_space<vmem>>, %arg4: memref<128x128xf32, #tpu.memory_space<vmem>>) attributes {dimension_semantics = [#tpu.dimension_semantics<parallel>], iteration_bounds = array<i64: 2>, scalar_prefetch = 0 : i64, scratch_operands = 0 : i64, tpu.core_type = #tpu.core_type<tc>, window_params = [{transform_indices = @transform_0, window_bounds = array<i64: 128, 128>}, {pipeline_mode = #tpu.pipeline_mode<synchronous>, transform_indices = @transform_1, window_bounds = array<i64: 7, 128, 128>}, {pipeline_mode = #tpu.pipeline_mode<synchronous>, transform_indices = @transform_2, window_bounds = array<i64: 7, 1, 128>}, {transform_indices = @transform_3, window_bounds = array<i64: 128, 128>}]} {
    %c0 = arith.constant 0 : index
    %c0_0 = arith.constant 0 : index
    %0 = vector.load %arg1[%c0, %c0_0] : memref<128x128xf32, #tpu.memory_space<vmem>>, vector<128x128xf32>
    %c0_1 = arith.constant 0 : index
    %c0_2 = arith.constant 0 : index
    %c0_3 = arith.constant 0 : index
    %1 = vector.load %arg2[%c0_1, %c0_2, %c0_3] : memref<7x128x128xf32, #tpu.memory_space<vmem>>, vector<1x128x128xf32>
    %2 = vector.shape_cast %1 : vector<1x128x128xf32> to vector<128x128xf32>
    %cst = arith.constant dense<0.000000e+00> : vector<128x128xf32>
    %3 = tpu.matmul %0, %2, %cst {dimension_numbers = #tpu.dot_dimension_numbers<[1], [0], [0], [1], [0, 0, 1, 1], [], []>} : vector<128x128xf32>, vector<128x128xf32>, vector<128x128xf32> -> vector<128x128xf32>
    %c0_4 = arith.constant 0 : index
    %c0_5 = arith.constant 0 : index
    %c0_6 = arith.constant 0 : index
    %4 = vector.load %arg3[%c0_4, %c0_5, %c0_6] : memref<7x1x128xf32, #tpu.memory_space<vmem>>, vector<1x1x128xf32>
    %5 = vector.shape_cast %4 : vector<1x1x128xf32> to vector<1x128xf32>
    %6 = vector.broadcast %5 : vector<1x128xf32> to vector<128x128xf32>
    %7 = arith.addf %3, %6 : vector<128x128xf32>
    %cst_7 = arith.constant 0.000000e+00 : f32
    %8 = vector.broadcast %cst_7 : f32 to vector<128x128xf32>
    %9 = arith.maximumf %7, %8 : vector<128x128xf32>
    %10 = math.absf %7 : vector<128x128xf32>
    %cst_8 = arith.constant 0.000000e+00 : f32
    %11 = vector.broadcast %cst_8 : f32 to vector<128x128xf32>
    %12 = arith.subf %11, %10 : vector<128x128xf32>
    %13 = math.exp %12 : vector<128x128xf32>
    %14 = math.log1p %13 : vector<128x128xf32>
    %15 = arith.addf %9, %14 : vector<128x128xf32>
    %c1 = arith.constant 1 : index
    %c0_9 = arith.constant 0 : index
    %c0_10 = arith.constant 0 : index
    %16 = vector.load %arg2[%c1, %c0_9, %c0_10] : memref<7x128x128xf32, #tpu.memory_space<vmem>>, vector<1x128x128xf32>
    %17 = vector.shape_cast %16 : vector<1x128x128xf32> to vector<128x128xf32>
    %cst_11 = arith.constant dense<0.000000e+00> : vector<128x128xf32>
    %18 = tpu.matmul %15, %17, %cst_11 {dimension_numbers = #tpu.dot_dimension_numbers<[1], [0], [0], [1], [0, 0, 1, 1], [], []>} : vector<128x128xf32>, vector<128x128xf32>, vector<128x128xf32> -> vector<128x128xf32>
    %c1_12 = arith.constant 1 : index
    %c0_13 = arith.constant 0 : index
    %c0_14 = arith.constant 0 : index
    %19 = vector.load %arg3[%c1_12, %c0_13, %c0_14] : memref<7x1x128xf32, #tpu.memory_space<vmem>>, vector<1x1x128xf32>
    %20 = vector.shape_cast %19 : vector<1x1x128xf32> to vector<1x128xf32>
    %21 = vector.broadcast %20 : vector<1x128xf32> to vector<128x128xf32>
    %22 = arith.addf %18, %21 : vector<128x128xf32>
    %cst_15 = arith.constant 0.000000e+00 : f32
    %23 = vector.broadcast %cst_15 : f32 to vector<128x128xf32>
    %24 = arith.maximumf %22, %23 : vector<128x128xf32>
    %25 = math.absf %22 : vector<128x128xf32>
    %cst_16 = arith.constant 0.000000e+00 : f32
    %26 = vector.broadcast %cst_16 : f32 to vector<128x128xf32>
    %27 = arith.subf %26, %25 : vector<128x128xf32>
    %28 = math.exp %27 : vector<128x128xf32>
    %29 = math.log1p %28 : vector<128x128xf32>
    %30 = arith.addf %24, %29 : vector<128x128xf32>
    %c2 = arith.constant 2 : index
    %c0_17 = arith.constant 0 : index
    %c0_18 = arith.constant 0 : index
    %31 = vector.load %arg2[%c2, %c0_17, %c0_18] : memref<7x128x128xf32, #tpu.memory_space<vmem>>, vector<1x128x128xf32>
    %32 = vector.shape_cast %31 : vector<1x128x128xf32> to vector<128x128xf32>
    %cst_19 = arith.constant dense<0.000000e+00> : vector<128x128xf32>
    %33 = tpu.matmul %30, %32, %cst_19 {dimension_numbers = #tpu.dot_dimension_numbers<[1], [0], [0], [1], [0, 0, 1, 1], [], []>} : vector<128x128xf32>, vector<128x128xf32>, vector<128x128xf32> -> vector<128x128xf32>
    %c2_20 = arith.constant 2 : index
    %c0_21 = arith.constant 0 : index
    %c0_22 = arith.constant 0 : index
    %34 = vector.load %arg3[%c2_20, %c0_21, %c0_22] : memref<7x1x128xf32, #tpu.memory_space<vmem>>, vector<1x1x128xf32>
    %35 = vector.shape_cast %34 : vector<1x1x128xf32> to vector<1x128xf32>
    %36 = vector.broadcast %35 : vector<1x128xf32> to vector<128x128xf32>
    %37 = arith.addf %33, %36 : vector<128x128xf32>
    %c3 = arith.constant 3 : index
    %c0_23 = arith.constant 0 : index
    %c0_24 = arith.constant 0 : index
    %38 = vector.load %arg2[%c3, %c0_23, %c0_24] : memref<7x128x128xf32, #tpu.memory_space<vmem>>, vector<1x128x128xf32>
    %39 = vector.shape_cast %38 : vector<1x128x128xf32> to vector<128x128xf32>
    %cst_25 = arith.constant dense<0.000000e+00> : vector<128x128xf32>
    %40 = tpu.matmul %37, %39, %cst_25 {dimension_numbers = #tpu.dot_dimension_numbers<[1], [0], [0], [1], [0, 0, 1, 1], [], []>} : vector<128x128xf32>, vector<128x128xf32>, vector<128x128xf32> -> vector<128x128xf32>
    %c3_26 = arith.constant 3 : index
    %c0_27 = arith.constant 0 : index
    %c0_28 = arith.constant 0 : index
    %41 = vector.load %arg3[%c3_26, %c0_27, %c0_28] : memref<7x1x128xf32, #tpu.memory_space<vmem>>, vector<1x1x128xf32>
    %42 = vector.shape_cast %41 : vector<1x1x128xf32> to vector<1x128xf32>
    %43 = vector.broadcast %42 : vector<1x128xf32> to vector<128x128xf32>
    %44 = arith.addf %40, %43 : vector<128x128xf32>
    %cst_29 = arith.constant 0.000000e+00 : f32
    %45 = vector.broadcast %cst_29 : f32 to vector<128x128xf32>
    %46 = arith.maximumf %44, %45 : vector<128x128xf32>
    %47 = math.absf %44 : vector<128x128xf32>
    %cst_30 = arith.constant 0.000000e+00 : f32
    %48 = vector.broadcast %cst_30 : f32 to vector<128x128xf32>
    %49 = arith.subf %48, %47 : vector<128x128xf32>
    %50 = math.exp %49 : vector<128x128xf32>
    %51 = math.log1p %50 : vector<128x128xf32>
    %52 = arith.addf %46, %51 : vector<128x128xf32>
    %c4 = arith.constant 4 : index
    %c0_31 = arith.constant 0 : index
    %c0_32 = arith.constant 0 : index
    %53 = vector.load %arg2[%c4, %c0_31, %c0_32] : memref<7x128x128xf32, #tpu.memory_space<vmem>>, vector<1x128x128xf32>
    %54 = vector.shape_cast %53 : vector<1x128x128xf32> to vector<128x128xf32>
    %cst_33 = arith.constant dense<0.000000e+00> : vector<128x128xf32>
    %55 = tpu.matmul %52, %54, %cst_33 {dimension_numbers = #tpu.dot_dimension_numbers<[1], [0], [0], [1], [0, 0, 1, 1], [], []>} : vector<128x128xf32>, vector<128x128xf32>, vector<128x128xf32> -> vector<128x128xf32>
    %c4_34 = arith.constant 4 : index
    %c0_35 = arith.constant 0 : index
    %c0_36 = arith.constant 0 : index
    %56 = vector.load %arg3[%c4_34, %c0_35, %c0_36] : memref<7x1x128xf32, #tpu.memory_space<vmem>>, vector<1x1x128xf32>
    %57 = vector.shape_cast %56 : vector<1x1x128xf32> to vector<1x128xf32>
    %58 = vector.broadcast %57 : vector<1x128xf32> to vector<128x128xf32>
    %59 = arith.addf %55, %58 : vector<128x128xf32>
    %cst_37 = arith.constant 0.000000e+00 : f32
    %60 = vector.broadcast %cst_37 : f32 to vector<128x128xf32>
    %61 = arith.maximumf %59, %60 : vector<128x128xf32>
    %62 = math.absf %59 : vector<128x128xf32>
    %cst_38 = arith.constant 0.000000e+00 : f32
    %63 = vector.broadcast %cst_38 : f32 to vector<128x128xf32>
    %64 = arith.subf %63, %62 : vector<128x128xf32>
    %65 = math.exp %64 : vector<128x128xf32>
    %66 = math.log1p %65 : vector<128x128xf32>
    %67 = arith.addf %61, %66 : vector<128x128xf32>
    %c5 = arith.constant 5 : index
    %c0_39 = arith.constant 0 : index
    %c0_40 = arith.constant 0 : index
    %68 = vector.load %arg2[%c5, %c0_39, %c0_40] : memref<7x128x128xf32, #tpu.memory_space<vmem>>, vector<1x128x128xf32>
    %69 = vector.shape_cast %68 : vector<1x128x128xf32> to vector<128x128xf32>
    %cst_41 = arith.constant dense<0.000000e+00> : vector<128x128xf32>
    %70 = tpu.matmul %67, %69, %cst_41 {dimension_numbers = #tpu.dot_dimension_numbers<[1], [0], [0], [1], [0, 0, 1, 1], [], []>} : vector<128x128xf32>, vector<128x128xf32>, vector<128x128xf32> -> vector<128x128xf32>
    %c5_42 = arith.constant 5 : index
    %c0_43 = arith.constant 0 : index
    %c0_44 = arith.constant 0 : index
    %71 = vector.load %arg3[%c5_42, %c0_43, %c0_44] : memref<7x1x128xf32, #tpu.memory_space<vmem>>, vector<1x1x128xf32>
    %72 = vector.shape_cast %71 : vector<1x1x128xf32> to vector<1x128xf32>
    %73 = vector.broadcast %72 : vector<1x128xf32> to vector<128x128xf32>
    %74 = arith.addf %70, %73 : vector<128x128xf32>
    %cst_45 = arith.constant 0.000000e+00 : f32
    %75 = vector.broadcast %cst_45 : f32 to vector<128x128xf32>
    %76 = arith.maximumf %74, %75 : vector<128x128xf32>
    %77 = math.absf %74 : vector<128x128xf32>
    %cst_46 = arith.constant 0.000000e+00 : f32
    %78 = vector.broadcast %cst_46 : f32 to vector<128x128xf32>
    %79 = arith.subf %78, %77 : vector<128x128xf32>
    %80 = math.exp %79 : vector<128x128xf32>
    %81 = math.log1p %80 : vector<128x128xf32>
    %82 = arith.addf %76, %81 : vector<128x128xf32>
    %c6 = arith.constant 6 : index
    %c0_47 = arith.constant 0 : index
    %c0_48 = arith.constant 0 : index
    %83 = vector.load %arg2[%c6, %c0_47, %c0_48] : memref<7x128x128xf32, #tpu.memory_space<vmem>>, vector<1x128x128xf32>
    %84 = vector.shape_cast %83 : vector<1x128x128xf32> to vector<128x128xf32>
    %cst_49 = arith.constant dense<0.000000e+00> : vector<128x128xf32>
    %85 = tpu.matmul %82, %84, %cst_49 {dimension_numbers = #tpu.dot_dimension_numbers<[1], [0], [0], [1], [0, 0, 1, 1], [], []>} : vector<128x128xf32>, vector<128x128xf32>, vector<128x128xf32> -> vector<128x128xf32>
    %c6_50 = arith.constant 6 : index
    %c0_51 = arith.constant 0 : index
    %c0_52 = arith.constant 0 : index
    %86 = vector.load %arg3[%c6_50, %c0_51, %c0_52] : memref<7x1x128xf32, #tpu.memory_space<vmem>>, vector<1x1x128xf32>
    %87 = vector.shape_cast %86 : vector<1x1x128xf32> to vector<1x128xf32>
    %88 = vector.broadcast %87 : vector<1x128xf32> to vector<128x128xf32>
    %89 = arith.addf %85, %88 : vector<128x128xf32>
    %c0_53 = arith.constant 0 : index
    %c0_54 = arith.constant 0 : index
    %90 = vector.load %arg4[%c0_53, %c0_54] : memref<128x128xf32, #tpu.memory_space<vmem>>, vector<128x128xf32>
    tpu.vector_store %arg4[%c0_53, %c0_54], %89 {strides = array<i32>} : memref<128x128xf32, #tpu.memory_space<vmem>>, vector<128x128xf32>,
    return
  }
  func.func @transform_0(%arg0: i32) -> (i32, i32) {
    %c0_i32 = arith.constant 0 : i32
    %c0_i32_0 = arith.constant 0 : i32
    return %arg0, %c0_i32 : i32, i32
  }
  func.func @transform_1(%arg0: i32) -> (i32, i32, i32) {
    %c0_i32 = arith.constant 0 : i32
    %c0_i32_0 = arith.constant 0 : i32
    %c0_i32_1 = arith.constant 0 : i32
    %c0_i32_2 = arith.constant 0 : i32
    return %c0_i32, %c0_i32_0, %c0_i32_1 : i32, i32, i32
  }
  func.func @transform_2(%arg0: i32) -> (i32, i32, i32) {
    %c0_i32 = arith.constant 0 : i32
    %c0_i32_0 = arith.constant 0 : i32
    %c0_i32_1 = arith.constant 0 : i32
    %c0_i32_2 = arith.constant 0 : i32
    return %c0_i32, %c0_i32_0, %c0_i32_1 : i32, i32, i32
  }
  func.func @transform_3(%arg0: i32) -> (i32, i32) {
    %c0_i32 = arith.constant 0 : i32
    %c0_i32_0 = arith.constant 0 : i32
    return %arg0, %c0_i32 : i32, i32
  }
}

</mosaic_0001>

<llo_original>
// kernel: neuralnet_forward.1
$region0: #{neuralnet_forward.1}
  #allocation0 [shape = 'u32[]', space=smem, size = 0x4, offset = 0x4, fixed_abs, tag = 'smem constant byte address 0x4 - core index']
  #allocation1 [shape = 'u32[144,128]{1,0:T(1,128)}', space=vmem, size = 0x12000, scoped, tag = 'internal scratch']
  %s0 = inlined_call_operand.vmem [shape: f32[256,128], index: 0, kind: input, shape index: {}]
  %s1 = inlined_call_operand.vmem [shape: f32[7,128,128], index: 1, kind: input, shape index: {}]
  %s2 = inlined_call_operand.vmem [shape: f32[7,1,128], index: 2, kind: input, shape index: {}]
  %s3 = inlined_call_operand.vmem [shape: f32[256,128], index: 3, kind: output, shape index: {}]
  %s4 = sld [smem:[#allocation0]]
  $region45: #{neuralnet_forward.1} parent=0
    _
  %s6 = ssub.s32 1, %s4
  %s7 = scalar_select 0, %s6, %s4
  loop: start=0, step=1, limit=4
  $region2: #{neuralnet_forward.1} parent=0 // loop_pre_header
    _
  $region3: #{neuralnet_forward.1} parent=0 // loop_header
    %s9 = sphi 0, %s13
    %p10 = scmp.ge.s32.totalorder %s9, 4
    %s19 = sphi 0, %s21
    %s22 = sphi 0, %s19
    %s23 = sphi 0, %s22
    %s39 = sphi 0, %s23
    %s43 = sphi 0, %s43
    %s45 = sphi 0, %s43
    %s46 = sphi 0, %s45
    %s60 = sphi 0, %s46
    %s64 = sphi 0, %s64
    %s66 = sphi 0, %s64
    %s67 = sphi 0, %s66
    %s81 = sphi 0, %s67
    %s87 = sphi 0, %s89
    %s90 = sphi 0, %s87
    %s91 = sphi 0, %s90
    %s107 = sphi 0, %s91
  $region4: #{neuralnet_forward.1} parent=0 // loop_header_branch
    %12 = sbr.rel (%p10) target = $region8
  $region5: #{neuralnet_forward.1} parent=0 // loop_body
    %s14 = ssub.s32 %s9, 1
    %s15 = ssub.s32 %s9, 2
    %s16 = sadd.s32 %s9, 1
    %s17 = ssub.s32 %s9, %s16
    %p18 = scmp.eq.s32.totalorder %s17, 0
    %s20 = sadd.s32 %s19, 1
    %s21 = scalar_select %p18, %s19, %s20
    %p24 = pneg %p18
    %p25 = scmp.eq.s32.totalorder %s9, 1
    %p26 = por %p24, %p25
    %p27 = scmp.ne.s32.totalorder %s19, %s22
    %p28 = scmp.eq.s32.totalorder %s9, 0
    %p29 = por %p27, %p28
    %p30 = scmp.ne.s32.totalorder %s19, %s22
    %p31 = scmp.eq.s32.totalorder %s14, 1
    %p32 = por %p30, %p31
    %p33 = scmp.ne.s32.totalorder %s22, %s23
    %p34 = scmp.eq.s32.totalorder %s14, 0
    %p35 = por %p33, %p34
    %p36 = scmp.ne.s32.totalorder %s22, %s23
    %p37 = scmp.eq.s32.totalorder %s15, 1
    %p38 = por %p36, %p37
    %p40 = scmp.ne.s32.totalorder %s23, %s39
    %p41 = scmp.eq.s32.totalorder %s15, 0
    %p42 = por %p40, %p41
    %s44 = sadd.s32 %s43, 1
    %p47 = scmp.eq.s32.totalorder %s9, 1
    %p48 = scmp.ne.s32.totalorder %s43, %s45
    %p49 = scmp.eq.s32.totalorder %s9, 0
    %p50 = por %p48, %p49
    %p51 = scmp.ne.s32.totalorder %s43, %s45
    %p52 = scmp.eq.s32.totalorder %s14, 1
    %p53 = por %p51, %p52
    %p54 = scmp.ne.s32.totalorder %s45, %s46
    %p55 = scmp.eq.s32.totalorder %s14, 0
    %p56 = por %p54, %p55
    %p57 = scmp.ne.s32.totalorder %s45, %s46
    %p58 = scmp.eq.s32.totalorder %s15, 1
    %p59 = por %p57, %p58
    %p61 = scmp.ne.s32.totalorder %s46, %s60
    %p62 = scmp.eq.s32.totalorder %s15, 0
    %p63 = por %p61, %p62
    %s65 = sadd.s32 %s64, 1
    %p68 = scmp.eq.s32.totalorder %s9, 1
    %p69 = scmp.ne.s32.totalorder %s64, %s66
    %p70 = scmp.eq.s32.totalorder %s9, 0
    %p71 = por %p69, %p70
    %p72 = scmp.ne.s32.totalorder %s64, %s66
    %p73 = scmp.eq.s32.totalorder %s14, 1
    %p74 = por %p72, %p73
    %p75 = scmp.ne.s32.totalorder %s66, %s67
    %p76 = scmp.eq.s32.totalorder %s14, 0
    %p77 = por %p75, %p76
    %p78 = scmp.ne.s32.totalorder %s66, %s67
    %p79 = scmp.eq.s32.totalorder %s15, 1
    %p80 = por %p78, %p79
    %p82 = scmp.ne.s32.totalorder %s67, %s81
    %p83 = scmp.eq.s32.totalorder %s15, 0
    %p84 = por %p82, %p83
    %s85 = ssub.s32 %s9, %s16
    %p86 = scmp.eq.s32.totalorder %s85, 0
    %s88 = sadd.s32 %s87, 1
    %s89 = scalar_select %p86, %s87, %s88
    %p92 = pneg %p86
    %p93 = scmp.eq.s32.totalorder %s9, 1
    %p94 = por %p92, %p93
    %p95 = scmp.ne.s32.totalorder %s87, %s90
    %p96 = scmp.eq.s32.totalorder %s9, 0
    %p97 = por %p95, %p96
    %p98 = scmp.ne.s32.totalorder %s87, %s90
    %p99 = scmp.eq.s32.totalorder %s14, 1
    %p100 = por %p98, %p99
    %p101 = scmp.ne.s32.totalorder %s90, %s91
    %p102 = scmp.eq.s32.totalorder %s14, 0
    %p103 = por %p101, %p102
    %p104 = scmp.ne.s32.totalorder %s90, %s91
    %p105 = scmp.eq.s32.totalorder %s15, 1
    %p106 = por %p104, %p105
    %p108 = scmp.ne.s32.totalorder %s91, %s107
    %p109 = scmp.eq.s32.totalorder %s15, 0
    %p110 = por %p108, %p109
    %p111 = scmp.le.s32.totalorder 1, %s9
    %p112 = scmp.lt.s32.totalorder %s9, 3
    %p113 = pnand %p111, %p112
    %p114 = pneg %p113
    // Predicated region
    $region9: #{neuralnet_forward.1} parent=5 // pred_check
      _
    $region10: #{neuralnet_forward.1} parent=5 // pred_check_branch
      %116 = sbr.rel (%p113) target = $region12
    $region11: #{neuralnet_forward.1} parent=5 // pred_region
      %s117 = ssub.s32 %s9, 1
      // Predicated region
      $region13: #{neuralnet_forward.1} parent=11 // pred_check
        %p118 = pneg %p56
      $region14: #{neuralnet_forward.1} parent=11 // pred_check_branch
        %120 = sbr.rel (%p118) target = $region16
      $region15: #{neuralnet_forward.1} parent=11 // pred_region
        _
      $region16: #{neuralnet_forward.1} parent=11 // pred_fallthru
        _
      // Predicated region
      $region17: #{neuralnet_forward.1} parent=11 // pred_check
        %p121 = pneg %p77
      $region18: #{neuralnet_forward.1} parent=11 // pred_check_branch
        %123 = sbr.rel (%p121) target = $region20
      $region19: #{neuralnet_forward.1} parent=11 // pred_region
        _
      $region20: #{neuralnet_forward.1} parent=11 // pred_fallthru
        _
    $region12: #{neuralnet_forward.1} parent=5 // pred_fallthru
      _
    %p124 = scmp.lt.s32.totalorder %s9, 2
    // Predicated region
    $region21: #{neuralnet_forward.1} parent=5 // pred_check
      %p125 = pneg %p124
    $region22: #{neuralnet_forward.1} parent=5 // pred_check_branch
      %127 = sbr.rel (%p125) target = $region24
    $region23: #{neuralnet_forward.1} parent=5 // pred_region
      // Predicated region
      $region25: #{neuralnet_forward.1} parent=23 // pred_check
        %p128 = pneg %p29
      $region26: #{neuralnet_forward.1} parent=23 // pred_check_branch
        %130 = sbr.rel (%p128) target = $region28
      $region27: #{neuralnet_forward.1} parent=23 // pred_region
        %s131 = smul.u32 16, %s9
        %p132 = scmp.lt.s32.totalorder %s131, 31
        %s133 = scalar_select %p132, %s131, 31
        %s134 = smul.addr %s133, 8
        %s135 = scalar_lea.vmem %s0, %s134
        %s136 = smul.u32 16, %s9
      $region28: #{neuralnet_forward.1} parent=23 // pred_fallthru
        _
    $region24: #{neuralnet_forward.1} parent=5 // pred_fallthru
      _
    %p137 = scmp.le.s32.totalorder 1, %s9
    %p138 = scmp.lt.s32.totalorder %s9, 3
    %p139 = pnand %p137, %p138
    %p140 = pneg %p139
    // Predicated region
    $region29: #{neuralnet_forward.1} parent=5 // pred_check
      _
    $region30: #{neuralnet_forward.1} parent=5 // pred_check_branch
      %142 = sbr.rel (%p139) target = $region32
    $region31: #{neuralnet_forward.1} parent=5 // pred_region
      %s143 = ssub.s32 %s9, 1
      %s144 = smul.u32 16, %s14
      %p145 = scmp.lt.s32.totalorder %s144, 31
      %s146 = scalar_select %p145, %s144, 31
      %s147 = smul.addr %s146, 8
      %s148 = scalar_lea.vmem %s0, %s147
      %p149 = pneg %p35
      %p150 = pneg %p32
      %p151 = pneg %p56
      %p152 = pneg %p53
      %p153 = pneg %p77
      %p154 = pneg %p74
      %p155 = pneg %p103
      %p156 = pneg %p100
      %s157 = smul.u32 16, %s14
      %p158 = scmp.lt.s32.totalorder %s157, 31
      %s159 = scalar_select %p158, %s157, 31
      %s160 = smul.addr %s159, 8
      %s161 = scalar_lea.vmem %s3, %s160
      %s162 = smul.u32 16, %s14
      %p163 = scmp.lt.s32.totalorder %s162, 31
      %s164 = scalar_select %p163, %s162, 31
      %s165 = smul.addr %s164, 8
      %s166 = scalar_lea.vmem %s0, %s165
      %s167 = smul.u32 16, %s14
      %s168 = smul.u32 16, %s14
      %p169 = scmp.lt.s32.totalorder %s168, 31
      %s170 = scalar_select %p169, %s168, 31
      %s171 = smul.addr %s170, 8
      %s172 = scalar_lea.vmem %s3, %s171
      %s173 = smul.u32 16, %s14
      %v174 = vld [vmem:[%s166] sm:$0xff]
      %v175 = vld [vmem:[%s166 + $0x8] sm:$0xff]
      %v176 = vld [vmem:[%s166 + $0x10] sm:$0xff]
      %v177 = vld [vmem:[%s166 + $0x18] sm:$0xff]
      %v178 = vld [vmem:[%s166 + $0x20] sm:$0xff]
      %v179 = vld [vmem:[%s166 + $0x28] sm:$0xff]
      %v180 = vld [vmem:[%s166 + $0x30] sm:$0xff]
      %v181 = vld [vmem:[%s166 + $0x38] sm:$0xff]
      %v182 = vld [vmem:[%s166 + $0x40] sm:$0xff]
      %v183 = vld [vmem:[%s166 + $0x48] sm:$0xff]
      %v184 = vld [vmem:[%s166 + $0x50] sm:$0xff]
      %v185 = vld [vmem:[%s166 + $0x58] sm:$0xff]
      %v186 = vld [vmem:[%s166 + $0x60] sm:$0xff]
      %v187 = vld [vmem:[%s166 + $0x68] sm:$0xff]
      %v188 = vld [vmem:[%s166 + $0x70] sm:$0xff]
      %v189 = vld [vmem:[%s166 + $0x78] sm:$0xff]
      %v190 = vld [vmem:[%s1] sm:$0xff]
      %v191 = vld [vmem:[%s1 + $0x8] sm:$0xff]
      %v192 = vld [vmem:[%s1 + $0x10] sm:$0xff]
      %v193 = vld [vmem:[%s1 + $0x18] sm:$0xff]
      %v194 = vld [vmem:[%s1 + $0x20] sm:$0xff]
      %v195 = vld [vmem:[%s1 + $0x28] sm:$0xff]
      %v196 = vld [vmem:[%s1 + $0x30] sm:$0xff]
      %v197 = vld [vmem:[%s1 + $0x38] sm:$0xff]
      %v198 = vld [vmem:[%s1 + $0x40] sm:$0xff]
      %v199 = vld [vmem:[%s1 + $0x48] sm:$0xff]
      %v200 = vld [vmem:[%s1 + $0x50] sm:$0xff]
      %v201 = vld [vmem:[%s1 + $0x58] sm:$0xff]
      %v202 = vld [vmem:[%s1 + $0x60] sm:$0xff]
      %v203 = vld [vmem:[%s1 + $0x68] sm:$0xff]
      %v204 = vld [vmem:[%s1 + $0x70] sm:$0xff]
      %v205 = vld [vmem:[%s1 + $0x78] sm:$0xff]
      %v206 = vld [vmem:[%s2] sm:$0x1]
      %v208 = vlaneseq
      %v209 = vshrl.u32 %v208, 7
      %v210 = vsub.s32 0, %v209
      %v211 = vrot.slane %v206, %v210
      %213 = vmatprep.subr.mxu0 0.0
      %214 = vmatpush1.msra.mxu0 %v190
      %215 = vmatprep.subr.mxu0 0.0
      %216 = vmatpush1.msra.mxu0 %v191
      %217 = vmatprep.subr.mxu0 0.0
      %218 = vmatpush1.msra.mxu0 %v192
      %219 = vmatprep.subr.mxu0 0.0
      %220 = vmatpush1.msra.mxu0 %v193
      %221 = vmatprep.subr.mxu0 0.0
      %222 = vmatpush1.msra.mxu0 %v194
      %223 = vmatprep.subr.mxu0 0.0
      %224 = vmatpush1.msra.mxu0 %v195
      %225 = vmatprep.subr.mxu0 0.0
      %226 = vmatpush1.msra.mxu0 %v196
      %227 = vmatprep.subr.mxu0 0.0
      %228 = vmatpush1.msra.mxu0 %v197
      %229 = vmatprep.subr.mxu0 0.0
      %230 = vmatpush1.msra.mxu0 %v198
      %231 = vmatprep.subr.mxu0 0.0
      %232 = vmatpush1.msra.mxu0 %v199
      %233 = vmatprep.subr.mxu0 0.0
      %234 = vmatpush1.msra.mxu0 %v200
      %235 = vmatprep.subr.mxu0 0.0
      %236 = vmatpush1.msra.mxu0 %v201
      %237 = vmatprep.subr.mxu0 0.0
      %238 = vmatpush1.msra.mxu0 %v202
      %239 = vmatprep.subr.mxu0 0.0
      %240 = vmatpush1.msra.mxu0 %v203
      %241 = vmatprep.subr.mxu0 0.0
      %242 = vmatpush1.msra.mxu0 %v204
      %243 = vmatprep.subr.mxu0 0.0
      %244 = vmatpush1.msra.mxu0 %v205
      %245 = vmatprep.subr.mxu0 0.0
      %246 = vmatpush1.msra.mxu0 0.0
      %247 = vmatprep.subr.mxu0 0.0
      %248 = vmatpush1.msra.mxu0 0.0
      %249 = vmatprep.subr.mxu0 0.0
      %250 = vmatpush1.msra.mxu0 0.0
      %251 = vmatprep.subr.mxu0 0.0
      %252 = vmatpush1.msra.mxu0 0.0
      %253 = vmatprep.subr.mxu0 0.0
      %254 = vmatpush1.msra.mxu0 0.0
      %255 = vmatprep.subr.mxu0 0.0
      %256 = vmatpush1.msra.mxu0 0.0
      %257 = vmatprep.subr.mxu0 0.0
      %258 = vmatpush1.msra.mxu0 0.0
      %259 = vmatprep.subr.mxu0 0.0
      %260 = vmatpush1.msra.mxu0 0.0
      %261 = vmatprep.subr.mxu0 0.0
      %262 = vmatpush1.msra.mxu0 0.0
      %263 = vmatprep.subr.mxu0 0.0
      %264 = vmatpush1.msra.mxu0 0.0
      %265 = vmatprep.subr.mxu0 0.0
      %266 = vmatpush1.msra.mxu0 0.0
      %267 = vmatprep.subr.mxu0 0.0
      %268 = vmatpush1.msra.mxu0 0.0
      %269 = vmatprep.subr.mxu0 0.0
      %270 = vmatpush1.msra.mxu0 0.0
      %271 = vmatprep.subr.mxu0 0.0
      %272 = vmatpush1.msra.mxu0 0.0
      %273 = vmatprep.subr.mxu0 0.0
      %274 = vmatpush1.msra.mxu0 0.0
      %275 = vmatprep.subr.mxu0 0.0
      %276 = vmatpush1.msra.mxu0 0.0
      %277 = vmatprep.mubr.f32.mxu0 0.0
      %278 = vmatmul.mubr.f32.gmra.mrb[0].mxu0 %v174
      %v279 = vpop.f32.mrb[0].mxu0
      %v280 = vadd.f32 %v211, %v279
      %v281 = vpop.f32.mrb[0].mxu0
      %282 = vmatprep.mubr.f32.mxu0 0.0
      %283 = vmatmul.mubr.f32.gmra.mrb[0].mxu0 %v175
      %v284 = vpop.f32.mrb[0].mxu0
      %v285 = vadd.f32 %v211, %v284
      %v286 = vpop.f32.mrb[0].mxu0
      %287 = vmatprep.mubr.f32.mxu0 0.0
      %288 = vmatmul.mubr.f32.gmra.mrb[0].mxu0 %v176
      %v289 = vpop.f32.mrb[0].mxu0
      %v290 = vadd.f32 %v211, %v289
      %v291 = vpop.f32.mrb[0].mxu0
      %292 = vmatprep.mubr.f32.mxu0 0.0
      %293 = vmatmul.mubr.f32.gmra.mrb[0].mxu0 %v177
      %v294 = vpop.f32.mrb[0].mxu0
      %v295 = vadd.f32 %v211, %v294
      %v296 = vpop.f32.mrb[0].mxu0
      %297 = vmatprep.mubr.f32.mxu0 0.0
      %298 = vmatmul.mubr.f32.gmra.mrb[0].mxu0 %v178
      %v299 = vpop.f32.mrb[0].mxu0
      %v300 = vadd.f32 %v211, %v299
      %v301 = vpop.f32.mrb[0].mxu0
      %302 = vmatprep.mubr.f32.mxu0 0.0
      %303 = vmatmul.mubr.f32.gmra.mrb[0].mxu0 %v179
      %v304 = vpop.f32.mrb[0].mxu0
      %v305 = vadd.f32 %v211, %v304
      %v306 = vpop.f32.mrb[0].mxu0
      %307 = vmatprep.mubr.f32.mxu0 0.0
      %308 = vmatmul.mubr.f32.gmra.mrb[0].mxu0 %v180
      %v309 = vpop.f32.mrb[0].mxu0
      %v310 = vadd.f32 %v211, %v309
      %v311 = vpop.f32.mrb[0].mxu0
      %312 = vmatprep.mubr.f32.mxu0 0.0
      %313 = vmatmul.mubr.f32.gmra.mrb[0].mxu0 %v181
      %v314 = vpop.f32.mrb[0].mxu0
      %v315 = vadd.f32 %v211, %v314
      %v316 = vpop.f32.mrb[0].mxu0
      %317 = vmatprep.mubr.f32.mxu0 0.0
      %318 = vmatmul.mubr.f32.gmra.mrb[0].mxu0 %v182
      %v319 = vpop.f32.mrb[0].mxu0
      %v320 = vadd.f32 %v211, %v319
      %v321 = vpop.f32.mrb[0].mxu0
      %322 = vmatprep.mubr.f32.mxu0 0.0
      %323 = vmatmul.mubr.f32.gmra.mrb[0].mxu0 %v183
      %v324 = vpop.f32.mrb[0].mxu0
      %v325 = vadd.f32 %v211, %v324
      %v326 = vpop.f32.mrb[0].mxu0
      %327 = vmatprep.mubr.f32.mxu0 0.0
      %328 = vmatmul.mubr.f32.gmra.mrb[0].mxu0 %v184
      %v329 = vpop.f32.mrb[0].mxu0
      %v330 = vadd.f32 %v211, %v329
      %v331 = vpop.f32.mrb[0].mxu0
      %332 = vmatprep.mubr.f32.mxu0 0.0
      %333 = vmatmul.mubr.f32.gmra.mrb[0].mxu0 %v185
      %v334 = vpop.f32.mrb[0].mxu0
      %v335 = vadd.f32 %v211, %v334
      %v336 = vpop.f32.mrb[0].mxu0
      %337 = vmatprep.mubr.f32.mxu0 0.0
      %338 = vmatmul.mubr.f32.gmra.mrb[0].mxu0 %v186
      %v339 = vpop.f32.mrb[0].mxu0
      %v340 = vadd.f32 %v211, %v339
      %v341 = vpop.f32.mrb[0].mxu0
      %342 = vmatprep.mubr.f32.mxu0 0.0
      %343 = vmatmul.mubr.f32.gmra.mrb[0].mxu0 %v187
      %v344 = vpop.f32.mrb[0].mxu0
      %v345 = vadd.f32 %v211, %v344
      %v346 = vpop.f32.mrb[0].mxu0
      %347 = vmatprep.mubr.f32.mxu0 0.0
      %348 = vmatmul.mubr.f32.gmra.mrb[0].mxu0 %v188
      %v349 = vpop.f32.mrb[0].mxu0
      %v350 = vadd.f32 %v211, %v349
      %v351 = vpop.f32.mrb[0].mxu0
      %352 = vmatprep.mubr.f32.mxu0 0.0
      %353 = vmatmul.mubr.f32.gmra.mrb[0].mxu0 %v189
      %v354 = vpop.f32.mrb[0].mxu0
      %v355 = vadd.f32 %v211, %v354
      %v356 = vpop.f32.mrb[0].mxu0
      %357 = vdwg.mxu0
      %v358 = vmax.f32 %v280, 0.0
      %v359 = vmax.f32 %v285, 0.0
      %v360 = vmax.f32 %v290, 0.0
      %v361 = vmax.f32 %v295, 0.0
      %v362 = vmax.f32 %v300, 0.0
      %v363 = vmax.f32 %v305, 0.0
      %v364 = vmax.f32 %v310, 0.0
      %v365 = vmax.f32 %v315, 0.0
      %v366 = vmax.f32 %v320, 0.0
      %v367 = vmax.f32 %v325, 0.0
      %v368 = vmax.f32 %v330, 0.0
      %v369 = vmax.f32 %v335, 0.0
      %v370 = vmax.f32 %v340, 0.0
      %v371 = vmax.f32 %v345, 0.0
      %v372 = vmax.f32 %v350, 0.0
      %v373 = vmax.f32 %v355, 0.0
      %v374 = vand.u32 2147483647, %v280
      %v375 = vand.u32 2147483647, %v285
      %v376 = vand.u32 2147483647, %v290
      %v377 = vand.u32 2147483647, %v295
      %v378 = vand.u32 2147483647, %v300
      %v379 = vand.u32 2147483647, %v305
      %v380 = vand.u32 2147483647, %v310
      %v381 = vand.u32 2147483647, %v315
      %v382 = vand.u32 2147483647, %v320
      %v383 = vand.u32 2147483647, %v325
      %v384 = vand.u32 2147483647, %v330
      %v385 = vand.u32 2147483647, %v335
      %v386 = vand.u32 2147483647, %v340
      %v387 = vand.u32 2147483647, %v345
      %v388 = vand.u32 2147483647, %v350
      %v389 = vand.u32 2147483647, %v355
      %v390 = vsub.f32 0.0, %v374
      %v391 = vsub.f32 0.0, %v375
      %v392 = vsub.f32 0.0, %v376
      %v393 = vsub.f32 0.0, %v377
      %v394 = vsub.f32 0.0, %v378
      %v395 = vsub.f32 0.0, %v379
      %v396 = vsub.f32 0.0, %v380
      %v397 = vsub.f32 0.0, %v381
      %v398 = vsub.f32 0.0, %v382
      %v399 = vsub.f32 0.0, %v383
      %v400 = vsub.f32 0.0, %v384
      %v401 = vsub.f32 0.0, %v385
      %v402 = vsub.f32 0.0, %v386
      %v403 = vsub.f32 0.0, %v387
      %v404 = vsub.f32 0.0, %v388
      %v405 = vsub.f32 0.0, %v389
      %v406 = vmul.f32 %v390, 1.442695
      %v407 = vpow.pop %v406
      %v408 = vmul.f32 %v391, 1.442695
      %v409 = vpow.pop %v408
      %v410 = vmul.f32 %v392, 1.442695
      %v411 = vpow.pop %v410
      %v412 = vmul.f32 %v393, 1.442695
      %v413 = vpow.pop %v412
      %v414 = vmul.f32 %v394, 1.442695
      %v415 = vpow.pop %v414
      %v416 = vmul.f32 %v395, 1.442695
      %v417 = vpow.pop %v416
      %v418 = vmul.f32 %v396, 1.442695
      %v419 = vpow.pop %v418
      %v420 = vmul.f32 %v397, 1.442695
      %v421 = vpow.pop %v420
      %v422 = vmul.f32 %v398, 1.442695
      %v423 = vpow.pop %v422
      %v424 = vmul.f32 %v399, 1.442695
      %v425 = vpow.pop %v424
      %v426 = vmul.f32 %v400, 1.442695
      %v427 = vpow.pop %v426
      %v428 = vmul.f32 %v401, 1.442695
      %v429 = vpow.pop %v428
      %v430 = vmul.f32 %v402, 1.442695
      %v431 = vpow.pop %v430
      %v432 = vmul.f32 %v403, 1.442695
      %v433 = vpow.pop %v432
      %v434 = vmul.f32 %v404, 1.442695
      %v435 = vpow.pop %v434
      %v436 = vmul.f32 %v405, 1.442695
      %v437 = vpow.pop %v436
      %v438 = vadd.f32 %v407, 1.0
      %v439 = vlog2.pop %v438
      %v440 = vmul.f32 %v439, 0.6931472
      %v441 = vmul.f32 -0.5, %v407
      %v442 = vadd.f32 %v441, 1.0
      %v443 = vmul.f32 %v442, %v407
      %v444 = vand.u32 2147483647, %v407
      %vm445 = vcmp.lt.f32.partialorder %v444, 0.0004427343
      %v446 = vsel %vm445, %v443, %v440
      %v447 = vadd.f32 %v409, 1.0
      %v448 = vlog2.pop %v447
      %v449 = vmul.f32 %v448, 0.6931472
      %v450 = vmul.f32 -0.5, %v409
      %v451 = vadd.f32 %v450, 1.0
      %v452 = vmul.f32 %v451, %v409
      %v453 = vand.u32 2147483647, %v409
      %vm454 = vcmp.lt.f32.partialorder %v453, 0.0004427343
      %v455 = vsel %vm454, %v452, %v449
      %v456 = vadd.f32 %v411, 1.0
      %v457 = vlog2.pop %v456
      %v458 = vmul.f32 %v457, 0.6931472
      %v459 = vmul.f32 -0.5, %v411
      %v460 = vadd.f32 %v459, 1.0
      %v461 = vmul.f32 %v460, %v411
      %v462 = vand.u32 2147483647, %v411
      %vm463 = vcmp.lt.f32.partialorder %v462, 0.0004427343
      %v464 = vsel %vm463, %v461, %v458
      %v465 = vadd.f32 %v413, 1.0
      %v466 = vlog2.pop %v465
      %v467 = vmul.f32 %v466, 0.6931472
      %v468 = vmul.f32 -0.5, %v413
      %v469 = vadd.f32 %v468, 1.0
      %v470 = vmul.f32 %v469, %v413
      %v471 = vand.u32 2147483647, %v413
      %vm472 = vcmp.lt.f32.partialorder %v471, 0.0004427343
      %v473 = vsel %vm472, %v470, %v467
      %v474 = vadd.f32 %v415, 1.0
      %v475 = vlog2.pop %v474
      %v476 = vmul.f32 %v475, 0.6931472
      %v477 = vmul.f32 -0.5, %v415
      %v478 = vadd.f32 %v477, 1.0
      %v479 = vmul.f32 %v478, %v415
      %v480 = vand.u32 2147483647, %v415
      %vm481 = vcmp.lt.f32.partialorder %v480, 0.0004427343
      %v482 = vsel %vm481, %v479, %v476
      %v483 = vadd.f32 %v417, 1.0
      %v484 = vlog2.pop %v483
      %v485 = vmul.f32 %v484, 0.6931472
      %v486 = vmul.f32 -0.5, %v417
      %v487 = vadd.f32 %v486, 1.0
      %v488 = vmul.f32 %v487, %v417
      %v489 = vand.u32 2147483647, %v417
      %vm490 = vcmp.lt.f32.partialorder %v489, 0.0004427343
      %v491 = vsel %vm490, %v488, %v485
      %v492 = vadd.f32 %v419, 1.0
      %v493 = vlog2.pop %v492
      %v494 = vmul.f32 %v493, 0.6931472
      %v495 = vmul.f32 -0.5, %v419
      %v496 = vadd.f32 %v495, 1.0
      %v497 = vmul.f32 %v496, %v419
      %v498 = vand.u32 2147483647, %v419
      %vm499 = vcmp.lt.f32.partialorder %v498, 0.0004427343
      %v500 = vsel %vm499, %v497, %v494
      %v501 = vadd.f32 %v421, 1.0
      %v502 = vlog2.pop %v501
      %v503 = vmul.f32 %v502, 0.6931472
      %v504 = vmul.f32 -0.5, %v421
      %v505 = vadd.f32 %v504, 1.0
      %v506 = vmul.f32 %v505, %v421
      %v507 = vand.u32 2147483647, %v421
      %vm508 = vcmp.lt.f32.partialorder %v507, 0.0004427343
      %v509 = vsel %vm508, %v506, %v503
      %v510 = vadd.f32 %v423, 1.0
      %v511 = vlog2.pop %v510
      %v512 = vmul.f32 %v511, 0.6931472
      %v513 = vmul.f32 -0.5, %v423
      %v514 = vadd.f32 %v513, 1.0
      %v515 = vmul.f32 %v514, %v423
      %v516 = vand.u32 2147483647, %v423
      %vm517 = vcmp.lt.f32.partialorder %v516, 0.0004427343
      %v518 = vsel %vm517, %v515, %v512
      %v519 = vadd.f32 %v425, 1.0
      %v520 = vlog2.pop %v519
      %v521 = vmul.f32 %v520, 0.6931472
      %v522 = vmul.f32 -0.5, %v425
      %v523 = vadd.f32 %v522, 1.0
      %v524 = vmul.f32 %v523, %v425
      %v525 = vand.u32 2147483647, %v425
      %vm526 = vcmp.lt.f32.partialorder %v525, 0.0004427343
      %v527 = vsel %vm526, %v524, %v521
      %v528 = vadd.f32 %v427, 1.0
      %v529 = vlog2.pop %v528
      %v530 = vmul.f32 %v529, 0.6931472
      %v531 = vmul.f32 -0.5, %v427
      %v532 = vadd.f32 %v531, 1.0
      %v533 = vmul.f32 %v532, %v427
      %v534 = vand.u32 2147483647, %v427
      %vm535 = vcmp.lt.f32.partialorder %v534, 0.0004427343
      %v536 = vsel %vm535, %v533, %v530
      %v537 = vadd.f32 %v429, 1.0
      %v538 = vlog2.pop %v537
      %v539 = vmul.f32 %v538, 0.6931472
      %v540 = vmul.f32 -0.5, %v429
      %v541 = vadd.f32 %v540, 1.0
      %v542 = vmul.f32 %v541, %v429
      %v543 = vand.u32 2147483647, %v429
      %vm544 = vcmp.lt.f32.partialorder %v543, 0.0004427343
      %v545 = vsel %vm544, %v542, %v539
      %v546 = vadd.f32 %v431, 1.0
      %v547 = vlog2.pop %v546
      %v548 = vmul.f32 %v547, 0.6931472
      %v549 = vmul.f32 -0.5, %v431
      %v550 = vadd.f32 %v549, 1.0
      %v551 = vmul.f32 %v550, %v431
      %v552 = vand.u32 2147483647, %v431
      %vm553 = vcmp.lt.f32.partialorder %v552, 0.0004427343
      %v554 = vsel %vm553, %v551, %v548
      %v555 = vadd.f32 %v433, 1.0
      %v556 = vlog2.pop %v555
      %v557 = vmul.f32 %v556, 0.6931472
      %v558 = vmul.f32 -0.5, %v433
      %v559 = vadd.f32 %v558, 1.0
      %v560 = vmul.f32 %v559, %v433
      %v561 = vand.u32 2147483647, %v433
      %vm562 = vcmp.lt.f32.partialorder %v561, 0.0004427343
      %v563 = vsel %vm562, %v560, %v557
      %v564 = vadd.f32 %v435, 1.0
      %v565 = vlog2.pop %v564
      %v566 = vmul.f32 %v565, 0.6931472
      %v567 = vmul.f32 -0.5, %v435
      %v568 = vadd.f32 %v567, 1.0
      %v569 = vmul.f32 %v568, %v435
      %v570 = vand.u32 2147483647, %v435
      %vm571 = vcmp.lt.f32.partialorder %v570, 0.0004427343
      %v572 = vsel %vm571, %v569, %v566
      %v573 = vadd.f32 %v437, 1.0
      %v574 = vlog2.pop %v573
      %v575 = vmul.f32 %v574, 0.6931472
      %v576 = vmul.f32 -0.5, %v437
      %v577 = vadd.f32 %v576, 1.0
      %v578 = vmul.f32 %v577, %v437
      %v579 = vand.u32 2147483647, %v437
      %vm580 = vcmp.lt.f32.partialorder %v579, 0.0004427343
      %v581 = vsel %vm580, %v578, %v575
      %v582 = vadd.f32 %v358, %v446
      %v583 = vadd.f32 %v359, %v455
      %v584 = vadd.f32 %v360, %v464
      %v585 = vadd.f32 %v361, %v473
      %v586 = vadd.f32 %v362, %v482
      %v587 = vadd.f32 %v363, %v491
      %v588 = vadd.f32 %v364, %v500
      %v589 = vadd.f32 %v365, %v509
      %v590 = vadd.f32 %v366, %v518
      %v591 = vadd.f32 %v367, %v527
      %v592 = vadd.f32 %v368, %v536
      %v593 = vadd.f32 %v369, %v545
      %v594 = vadd.f32 %v370, %v554
      %v595 = vadd.f32 %v371, %v563
      %v596 = vadd.f32 %v372, %v572
      %v597 = vadd.f32 %v373, %v581
      %s598 = scalar_lea.vmem %s1, 128
      %v599 = vld [vmem:[%s598] sm:$0xff]
      %v600 = vld [vmem:[%s598 + $0x8] sm:$0xff]
      %v601 = vld [vmem:[%s598 + $0x10] sm:$0xff]
      %v602 = vld [vmem:[%s598 + $0x18] sm:$0xff]
      %v603 = vld [vmem:[%s598 + $0x20] sm:$0xff]
      %v604 = vld [vmem:[%s598 + $0x28] sm:$0xff]
      %v605 = vld [vmem:[%s598 + $0x30] sm:$0xff]
      %v606 = vld [vmem:[%s598 + $0x38] sm:$0xff]
      %v607 = vld [vmem:[%s598 + $0x40] sm:$0xff]
      %v608 = vld [vmem:[%s598 + $0x48] sm:$0xff]
      %v609 = vld [vmem:[%s598 + $0x50] sm:$0xff]
      %v610 = vld [vmem:[%s598 + $0x58] sm:$0xff]
      %v611 = vld [vmem:[%s598 + $0x60] sm:$0xff]
      %v612 = vld [vmem:[%s598 + $0x68] sm:$0xff]
      %v613 = vld [vmem:[%s598 + $0x70] sm:$0xff]
      %v614 = vld [vmem:[%s598 + $0x78] sm:$0xff]
      %s615 = scalar_lea.vmem %s2, 1
      %v616 = vld [vmem:[%s615] sm:$0x1]
      %v618 = vlaneseq
      %v619 = vshrl.u32 %v618, 7
      %v620 = vsub.s32 0, %v619
      %v621 = vrot.slane %v616, %v620
      %623 = vmatprep.subr.mxu0 0.0
      %624 = vmatpush1.msra.mxu0 %v599
      %625 = vmatprep.subr.mxu0 0.0
      %626 = vmatpush1.msra.mxu0 %v600
      %627 = vmatprep.subr.mxu0 0.0
      %628 = vmatpush1.msra.mxu0 %v601
      %629 = vmatprep.subr.mxu0 0.0
      %630 = vmatpush1.msra.mxu0 %v602
      %631 = vmatprep.subr.mxu0 0.0
      %632 = vmatpush1.msra.mxu0 %v603
      %633 = vmatprep.subr.mxu0 0.0
      %634 = vmatpush1.msra.mxu0 %v604
      %635 = vmatprep.subr.mxu0 0.0
      %636 = vmatpush1.msra.mxu0 %v605
      %637 = vmatprep.subr.mxu0 0.0
      %638 = vmatpush1.msra.mxu0 %v606
      %639 = vmatprep.subr.mxu0 0.0
      %640 = vmatpush1.msra.mxu0 %v607
      %641 = vmatprep.subr.mxu0 0.0
      %642 = vmatpush1.msra.mxu0 %v608
      %643 = vmatprep.subr.mxu0 0.0
      %644 = vmatpush1.msra.mxu0 %v609
      %645 = vmatprep.subr.mxu0 0.0
      %646 = vmatpush1.msra.mxu0 %v610
      %647 = vmatprep.subr.mxu0 0.0
      %648 = vmatpush1.msra.mxu0 %v611
      %649 = vmatprep.subr.mxu0 0.0
      %650 = vmatpush1.msra.mxu0 %v612
      %651 = vmatprep.subr.mxu0 0.0
      %652 = vmatpush1.msra.mxu0 %v613
      %653 = vmatprep.subr.mxu0 0.0
      %654 = vmatpush1.msra.mxu0 %v614
      %655 = vmatprep.subr.mxu0 0.0
      %656 = vmatpush1.msra.mxu0 0.0
      %657 = vmatprep.subr.mxu0 0.0
      %658 = vmatpush1.msra.mxu0 0.0
      %659 = vmatprep.subr.mxu0 0.0
      %660 = vmatpush1.msra.mxu0 0.0
      %661 = vmatprep.subr.mxu0 0.0
      %662 = vmatpush1.msra.mxu0 0.0
      %663 = vmatprep.subr.mxu0 0.0
      %664 = vmatpush1.msra.mxu0 0.0
      %665 = vmatprep.subr.mxu0 0.0
      %666 = vmatpush1.msra.mxu0 0.0
      %667 = vmatprep.subr.mxu0 0.0
      %668 = vmatpush1.msra.mxu0 0.0
      %669 = vmatprep.subr.mxu0 0.0
      %670 = vmatpush1.msra.mxu0 0.0
      %671 = vmatprep.subr.mxu0 0.0
      %672 = vmatpush1.msra.mxu0 0.0
      %673 = vmatprep.subr.mxu0 0.0
      %674 = vmatpush1.msra.mxu0 0.0
      %675 = vmatprep.subr.mxu0 0.0
      %676 = vmatpush1.msra.mxu0 0.0
      %677 = vmatprep.subr.mxu0 0.0
      %678 = vmatpush1.msra.mxu0 0.0
      %679 = vmatprep.subr.mxu0 0.0
      %680 = vmatpush1.msra.mxu0 0.0
      %681 = vmatprep.subr.mxu0 0.0
      %682 = vmatpush1.msra.mxu0 0.0
      %683 = vmatprep.subr.mxu0 0.0
      %684 = vmatpush1.msra.mxu0 0.0
      %685 = vmatprep.subr.mxu0 0.0
      %686 = vmatpush1.msra.mxu0 0.0
      %687 = vmatprep.mubr.f32.mxu0 0.0
      %688 = vmatmul.mubr.f32.gmra.mrb[0].mxu0 %v582
      %v689 = vpop.f32.mrb[0].mxu0
      %v690 = vadd.f32 %v621, %v689
      %v691 = vpop.f32.mrb[0].mxu0
      %692 = vmatprep.mubr.f32.mxu0 0.0
      %693 = vmatmul.mubr.f32.gmra.mrb[0].mxu0 %v583
      %v694 = vpop.f32.mrb[0].mxu0
      %v695 = vadd.f32 %v621, %v694
      %v696 = vpop.f32.mrb[0].mxu0
      %697 = vmatprep.mubr.f32.mxu0 0.0
      %698 = vmatmul.mubr.f32.gmra.mrb[0].mxu0 %v584
      %v699 = vpop.f32.mrb[0].mxu0
      %v700 = vadd.f32 %v621, %v699
      %v701 = vpop.f32.mrb[0].mxu0
      %702 = vmatprep.mubr.f32.mxu0 0.0
      %703 = vmatmul.mubr.f32.gmra.mrb[0].mxu0 %v585
      %v704 = vpop.f32.mrb[0].mxu0
      %v705 = vadd.f32 %v621, %v704
      %v706 = vpop.f32.mrb[0].mxu0
      %707 = vmatprep.mubr.f32.mxu0 0.0
      %708 = vmatmul.mubr.f32.gmra.mrb[0].mxu0 %v586
      %v709 = vpop.f32.mrb[0].mxu0
      %v710 = vadd.f32 %v621, %v709
      %v711 = vpop.f32.mrb[0].mxu0
      %712 = vmatprep.mubr.f32.mxu0 0.0
      %713 = vmatmul.mubr.f32.gmra.mrb[0].mxu0 %v587
      %v714 = vpop.f32.mrb[0].mxu0
      %v715 = vadd.f32 %v621, %v714
      %v716 = vpop.f32.mrb[0].mxu0
      %717 = vmatprep.mubr.f32.mxu0 0.0
      %718 = vmatmul.mubr.f32.gmra.mrb[0].mxu0 %v588
      %v719 = vpop.f32.mrb[0].mxu0
      %v720 = vadd.f32 %v621, %v719
      %v721 = vpop.f32.mrb[0].mxu0
      %722 = vmatprep.mubr.f32.mxu0 0.0
      %723 = vmatmul.mubr.f32.gmra.mrb[0].mxu0 %v589
      %v724 = vpop.f32.mrb[0].mxu0
      %v725 = vadd.f32 %v621, %v724
      %v726 = vpop.f32.mrb[0].mxu0
      %727 = vmatprep.mubr.f32.mxu0 0.0
      %728 = vmatmul.mubr.f32.gmra.mrb[0].mxu0 %v590
      %v729 = vpop.f32.mrb[0].mxu0
      %v730 = vadd.f32 %v621, %v729
      %v731 = vpop.f32.mrb[0].mxu0
      %732 = vmatprep.mubr.f32.mxu0 0.0
      %733 = vmatmul.mubr.f32.gmra.mrb[0].mxu0 %v591
      %v734 = vpop.f32.mrb[0].mxu0
      %v735 = vadd.f32 %v621, %v734
      %v736 = vpop.f32.mrb[0].mxu0
      %737 = vmatprep.mubr.f32.mxu0 0.0
      %738 = vmatmul.mubr.f32.gmra.mrb[0].mxu0 %v592
      %v739 = vpop.f32.mrb[0].mxu0
      %v740 = vadd.f32 %v621, %v739
      %v741 = vpop.f32.mrb[0].mxu0
      %742 = vmatprep.mubr.f32.mxu0 0.0
      %743 = vmatmul.mubr.f32.gmra.mrb[0].mxu0 %v593
      %v744 = vpop.f32.mrb[0].mxu0
      %v745 = vadd.f32 %v621, %v744
      %v746 = vpop.f32.mrb[0].mxu0
      %747 = vmatprep.mubr.f32.mxu0 0.0
      %748 = vmatmul.mubr.f32.gmra.mrb[0].mxu0 %v594
      %v749 = vpop.f32.mrb[0].mxu0
      %v750 = vadd.f32 %v621, %v749
      %v751 = vpop.f32.mrb[0].mxu0
      %752 = vmatprep.mubr.f32.mxu0 0.0
      %753 = vmatmul.mubr.f32.gmra.mrb[0].mxu0 %v595
      %v754 = vpop.f32.mrb[0].mxu0
      %v755 = vadd.f32 %v621, %v754
      %v756 = vpop.f32.mrb[0].mxu0
      %757 = vmatprep.mubr.f32.mxu0 0.0
      %758 = vmatmul.mubr.f32.gmra.mrb[0].mxu0 %v596
      %v759 = vpop.f32.mrb[0].mxu0
      %v760 = vadd.f32 %v621, %v759
      %v761 = vpop.f32.mrb[0].mxu0
      %762 = vmatprep.mubr.f32.mxu0 0.0
      %763 = vmatmul.mubr.f32.gmra.mrb[0].mxu0 %v597
      %v764 = vpop.f32.mrb[0].mxu0
      %v765 = vadd.f32 %v621, %v764
      %v766 = vpop.f32.mrb[0].mxu0
      %767 = vdwg.mxu0
      %v768 = vmax.f32 %v690, 0.0
      %v769 = vmax.f32 %v695, 0.0
      %v770 = vmax.f32 %v700, 0.0
      %v771 = vmax.f32 %v705, 0.0
      %v772 = vmax.f32 %v710, 0.0
      %v773 = vmax.f32 %v715, 0.0
      %v774 = vmax.f32 %v720, 0.0
      %v775 = vmax.f32 %v725, 0.0
      %v776 = vmax.f32 %v730, 0.0
      %v777 = vmax.f32 %v735, 0.0
      %v778 = vmax.f32 %v740, 0.0
      %v779 = vmax.f32 %v745, 0.0
      %v780 = vmax.f32 %v750, 0.0
      %v781 = vmax.f32 %v755, 0.0
      %v782 = vmax.f32 %v760, 0.0
      %v783 = vmax.f32 %v765, 0.0
      %v784 = vand.u32 2147483647, %v690
      %v785 = vand.u32 2147483647, %v695
      %v786 = vand.u32 2147483647, %v700
      %v787 = vand.u32 2147483647, %v705
      %v788 = vand.u32 2147483647, %v710
      %v789 = vand.u32 2147483647, %v715
      %v790 = vand.u32 2147483647, %v720
      %v791 = vand.u32 2147483647, %v725
      %v792 = vand.u32 2147483647, %v730
      %v793 = vand.u32 2147483647, %v735
      %v794 = vand.u32 2147483647, %v740
      %v795 = vand.u32 2147483647, %v745
      %v796 = vand.u32 2147483647, %v750
      %v797 = vand.u32 2147483647, %v755
      %v798 = vand.u32 2147483647, %v760
      %v799 = vand.u32 2147483647, %v765
      %v800 = vsub.f32 0.0, %v784
      %v801 = vsub.f32 0.0, %v785
      %v802 = vsub.f32 0.0, %v786
      %v803 = vsub.f32 0.0, %v787
      %v804 = vsub.f32 0.0, %v788
      %v805 = vsub.f32 0.0, %v789
      %v806 = vsub.f32 0.0, %v790
      %v807 = vsub.f32 0.0, %v791
      %v808 = vsub.f32 0.0, %v792
      %v809 = vsub.f32 0.0, %v793
      %v810 = vsub.f32 0.0, %v794
      %v811 = vsub.f32 0.0, %v795
      %v812 = vsub.f32 0.0, %v796
      %v813 = vsub.f32 0.0, %v797
      %v814 = vsub.f32 0.0, %v798
      %v815 = vsub.f32 0.0, %v799
      %v816 = vmul.f32 %v800, 1.442695
      %v817 = vpow.pop %v816
      %v818 = vmul.f32 %v801, 1.442695
      %v819 = vpow.pop %v818
      %v820 = vmul.f32 %v802, 1.442695
      %v821 = vpow.pop %v820
      %v822 = vmul.f32 %v803, 1.442695
      %v823 = vpow.pop %v822
      %v824 = vmul.f32 %v804, 1.442695
      %v825 = vpow.pop %v824
      %v826 = vmul.f32 %v805, 1.442695
      %v827 = vpow.pop %v826
      %v828 = vmul.f32 %v806, 1.442695
      %v829 = vpow.pop %v828
      %v830 = vmul.f32 %v807, 1.442695
      %v831 = vpow.pop %v830
      %v832 = vmul.f32 %v808, 1.442695
      %v833 = vpow.pop %v832
      %v834 = vmul.f32 %v809, 1.442695
      %v835 = vpow.pop %v834
      %v836 = vmul.f32 %v810, 1.442695
      %v837 = vpow.pop %v836
      %v838 = vmul.f32 %v811, 1.442695
      %v839 = vpow.pop %v838
      %v840 = vmul.f32 %v812, 1.442695
      %v841 = vpow.pop %v840
      %v842 = vmul.f32 %v813, 1.442695
      %v843 = vpow.pop %v842
      %v844 = vmul.f32 %v814, 1.442695
      %v845 = vpow.pop %v844
      %v846 = vmul.f32 %v815, 1.442695
      %v847 = vpow.pop %v846
      %v848 = vadd.f32 %v817, 1.0
      %v849 = vlog2.pop %v848
      %v850 = vmul.f32 %v849, 0.6931472
      %v851 = vmul.f32 -0.5, %v817
      %v852 = vadd.f32 %v851, 1.0
      %v853 = vmul.f32 %v852, %v817
      %v854 = vand.u32 2147483647, %v817
      %vm855 = vcmp.lt.f32.partialorder %v854, 0.0004427343
      %v856 = vsel %vm855, %v853, %v850
      %v857 = vadd.f32 %v819, 1.0
      %v858 = vlog2.pop %v857
      %v859 = vmul.f32 %v858, 0.6931472
      %v860 = vmul.f32 -0.5, %v819
      %v861 = vadd.f32 %v860, 1.0
      %v862 = vmul.f32 %v861, %v819
      %v863 = vand.u32 2147483647, %v819
      %vm864 = vcmp.lt.f32.partialorder %v863, 0.0004427343
      %v865 = vsel %vm864, %v862, %v859
      %v866 = vadd.f32 %v821, 1.0
      %v867 = vlog2.pop %v866
      %v868 = vmul.f32 %v867, 0.6931472
      %v869 = vmul.f32 -0.5, %v821
      %v870 = vadd.f32 %v869, 1.0
      %v871 = vmul.f32 %v870, %v821
      %v872 = vand.u32 2147483647, %v821
      %vm873 = vcmp.lt.f32.partialorder %v872, 0.0004427343
      %v874 = vsel %vm873, %v871, %v868
      %v875 = vadd.f32 %v823, 1.0
      %v876 = vlog2.pop %v875
      %v877 = vmul.f32 %v876, 0.6931472
      %v878 = vmul.f32 -0.5, %v823
      %v879 = vadd.f32 %v878, 1.0
      %v880 = vmul.f32 %v879, %v823
      %v881 = vand.u32 2147483647, %v823
      %vm882 = vcmp.lt.f32.partialorder %v881, 0.0004427343
      %v883 = vsel %vm882, %v880, %v877
      %v884 = vadd.f32 %v825, 1.0
      %v885 = vlog2.pop %v884
      %v886 = vmul.f32 %v885, 0.6931472
      %v887 = vmul.f32 -0.5, %v825
      %v888 = vadd.f32 %v887, 1.0
      %v889 = vmul.f32 %v888, %v825
      %v890 = vand.u32 2147483647, %v825
      %vm891 = vcmp.lt.f32.partialorder %v890, 0.0004427343
      %v892 = vsel %vm891, %v889, %v886
      %v893 = vadd.f32 %v827, 1.0
      %v894 = vlog2.pop %v893
      %v895 = vmul.f32 %v894, 0.6931472
      %v896 = vmul.f32 -0.5, %v827
      %v897 = vadd.f32 %v896, 1.0
      %v898 = vmul.f32 %v897, %v827
      %v899 = vand.u32 2147483647, %v827
      %vm900 = vcmp.lt.f32.partialorder %v899, 0.0004427343
      %v901 = vsel %vm900, %v898, %v895
      %v902 = vadd.f32 %v829, 1.0
      %v903 = vlog2.pop %v902
      %v904 = vmul.f32 %v903, 0.6931472
      %v905 = vmul.f32 -0.5, %v829
      %v906 = vadd.f32 %v905, 1.0
      %v907 = vmul.f32 %v906, %v829
      %v908 = vand.u32 2147483647, %v829
      %vm909 = vcmp.lt.f32.partialorder %v908, 0.0004427343
      %v910 = vsel %vm909, %v907, %v904
      %v911 = vadd.f32 %v831, 1.0
      %v912 = vlog2.pop %v911
      %v913 = vmul.f32 %v912, 0.6931472
      %v914 = vmul.f32 -0.5, %v831
      %v915 = vadd.f32 %v914, 1.0
      %v916 = vmul.f32 %v915, %v831
      %v917 = vand.u32 2147483647, %v831
      %vm918 = vcmp.lt.f32.partialorder %v917, 0.0004427343
      %v919 = vsel %vm918, %v916, %v913
      %v920 = vadd.f32 %v833, 1.0
      %v921 = vlog2.pop %v920
      %v922 = vmul.f32 %v921, 0.6931472
      %v923 = vmul.f32 -0.5, %v833
      %v924 = vadd.f32 %v923, 1.0
      %v925 = vmul.f32 %v924, %v833
      %v926 = vand.u32 2147483647, %v833
      %vm927 = vcmp.lt.f32.partialorder %v926, 0.0004427343
      %v928 = vsel %vm927, %v925, %v922
      %v929 = vadd.f32 %v835, 1.0
      %v930 = vlog2.pop %v929
      %v931 = vmul.f32 %v930, 0.6931472
      %v932 = vmul.f32 -0.5, %v835
      %v933 = vadd.f32 %v932, 1.0
      %v934 = vmul.f32 %v933, %v835
      %v935 = vand.u32 2147483647, %v835
      %vm936 = vcmp.lt.f32.partialorder %v935, 0.0004427343
      %v937 = vsel %vm936, %v934, %v931
      %v938 = vadd.f32 %v837, 1.0
      %v939 = vlog2.pop %v938
      %v940 = vmul.f32 %v939, 0.6931472
      %v941 = vmul.f32 -0.5, %v837
      %v942 = vadd.f32 %v941, 1.0
      %v943 = vmul.f32 %v942, %v837
      %v944 = vand.u32 2147483647, %v837
      %vm945 = vcmp.lt.f32.partialorder %v944, 0.0004427343
      %v946 = vsel %vm945, %v943, %v940
      %v947 = vadd.f32 %v839, 1.0
      %v948 = vlog2.pop %v947
      %v949 = vmul.f32 %v948, 0.6931472
      %v950 = vmul.f32 -0.5, %v839
      %v951 = vadd.f32 %v950, 1.0
      %v952 = vmul.f32 %v951, %v839
      %v953 = vand.u32 2147483647, %v839
      %vm954 = vcmp.lt.f32.partialorder %v953, 0.0004427343
      %v955 = vsel %vm954, %v952, %v949
      %v956 = vadd.f32 %v841, 1.0
      %v957 = vlog2.pop %v956
      %v958 = vmul.f32 %v957, 0.6931472
      %v959 = vmul.f32 -0.5, %v841
      %v960 = vadd.f32 %v959, 1.0
      %v961 = vmul.f32 %v960, %v841
      %v962 = vand.u32 2147483647, %v841
      %vm963 = vcmp.lt.f32.partialorder %v962, 0.0004427343
      %v964 = vsel %vm963, %v961, %v958
      %v965 = vadd.f32 %v843, 1.0
      %v966 = vlog2.pop %v965
      %v967 = vmul.f32 %v966, 0.6931472
      %v968 = vmul.f32 -0.5, %v843
      %v969 = vadd.f32 %v968, 1.0
      %v970 = vmul.f32 %v969, %v843
      %v971 = vand.u32 2147483647, %v843
      %vm972 = vcmp.lt.f32.partialorder %v971, 0.0004427343
      %v973 = vsel %vm972, %v970, %v967
      %v974 = vadd.f32 %v845, 1.0
      %v975 = vlog2.pop %v974
      %v976 = vmul.f32 %v975, 0.6931472
      %v977 = vmul.f32 -0.5, %v845
      %v978 = vadd.f32 %v977, 1.0
      %v979 = vmul.f32 %v978, %v845
      %v980 = vand.u32 2147483647, %v845
      %vm981 = vcmp.lt.f32.partialorder %v980, 0.0004427343
      %v982 = vsel %vm981, %v979, %v976
      %v983 = vadd.f32 %v847, 1.0
      %v984 = vlog2.pop %v983
      %v985 = vmul.f32 %v984, 0.6931472
      %v986 = vmul.f32 -0.5, %v847
      %v987 = vadd.f32 %v986, 1.0
      %v988 = vmul.f32 %v987, %v847
      %v989 = vand.u32 2147483647, %v847
      %vm990 = vcmp.lt.f32.partialorder %v989, 0.0004427343
      %v991 = vsel %vm990, %v988, %v985
      %v992 = vadd.f32 %v768, %v856
      %v993 = vadd.f32 %v769, %v865
      %v994 = vadd.f32 %v770, %v874
      %v995 = vadd.f32 %v771, %v883
      %v996 = vadd.f32 %v772, %v892
      %v997 = vadd.f32 %v773, %v901
      %v998 = vadd.f32 %v774, %v910
      %v999 = vadd.f32 %v775, %v919
      %v1000 = vadd.f32 %v776, %v928
      %v1001 = vadd.f32 %v777, %v937
      %v1002 = vadd.f32 %v778, %v946
      %v1003 = vadd.f32 %v779, %v955
      %v1004 = vadd.f32 %v780, %v964
      %v1005 = vadd.f32 %v781, %v973
      %v1006 = vadd.f32 %v782, %v982
      %v1007 = vadd.f32 %v783, %v991
      %s1008 = scalar_lea.vmem %s1, 256
      %v1009 = vld [vmem:[%s1008] sm:$0xff]
      %v1010 = vld [vmem:[%s1008 + $0x8] sm:$0xff]
      %v1011 = vld [vmem:[%s1008 + $0x10] sm:$0xff]
      %v1012 = vld [vmem:[%s1008 + $0x18] sm:$0xff]
      %v1013 = vld [vmem:[%s1008 + $0x20] sm:$0xff]
      %v1014 = vld [vmem:[%s1008 + $0x28] sm:$0xff]
      %v1015 = vld [vmem:[%s1008 + $0x30] sm:$0xff]
      %v1016 = vld [vmem:[%s1008 + $0x38] sm:$0xff]
      %v1017 = vld [vmem:[%s1008 + $0x40] sm:$0xff]
      %v1018 = vld [vmem:[%s1008 + $0x48] sm:$0xff]
      %v1019 = vld [vmem:[%s1008 + $0x50] sm:$0xff]
      %v1020 = vld [vmem:[%s1008 + $0x58] sm:$0xff]
      %v1021 = vld [vmem:[%s1008 + $0x60] sm:$0xff]
      %v1022 = vld [vmem:[%s1008 + $0x68] sm:$0xff]
      %v1023 = vld [vmem:[%s1008 + $0x70] sm:$0xff]
      %v1024 = vld [vmem:[%s1008 + $0x78] sm:$0xff]
      %s1025 = scalar_lea.vmem %s2, 2
      %v1026 = vld [vmem:[%s1025] sm:$0x1]
      %v1028 = vlaneseq
      %v1029 = vshrl.u32 %v1028, 7
      %v1030 = vsub.s32 0, %v1029
      %v1031 = vrot.slane %v1026, %v1030
      %1033 = vmatprep.subr.mxu0 0.0
      %1034 = vmatpush1.msra.mxu0 %v1009
      %1035 = vmatprep.subr.mxu0 0.0
      %1036 = vmatpush1.msra.mxu0 %v1010
      %1037 = vmatprep.subr.mxu0 0.0
      %1038 = vmatpush1.msra.mxu0 %v1011
      %1039 = vmatprep.subr.mxu0 0.0
      %1040 = vmatpush1.msra.mxu0 %v1012
      %1041 = vmatprep.subr.mxu0 0.0
      %1042 = vmatpush1.msra.mxu0 %v1013
      %1043 = vmatprep.subr.mxu0 0.0
      %1044 = vmatpush1.msra.mxu0 %v1014
      %1045 = vmatprep.subr.mxu0 0.0
      %1046 = vmatpush1.msra.mxu0 %v1015
      %1047 = vmatprep.subr.mxu0 0.0
      %1048 = vmatpush1.msra.mxu0 %v1016
      %1049 = vmatprep.subr.mxu0 0.0
      %1050 = vmatpush1.msra.mxu0 %v1017
      %1051 = vmatprep.subr.mxu0 0.0
      %1052 = vmatpush1.msra.mxu0 %v1018
      %1053 = vmatprep.subr.mxu0 0.0
      %1054 = vmatpush1.msra.mxu0 %v1019
      %1055 = vmatprep.subr.mxu0 0.0
      %1056 = vmatpush1.msra.mxu0 %v1020
      %1057 = vmatprep.subr.mxu0 0.0
      %1058 = vmatpush1.msra.mxu0 %v1021
      %1059 = vmatprep.subr.mxu0 0.0
      %1060 = vmatpush1.msra.mxu0 %v1022
      %1061 = vmatprep.subr.mxu0 0.0
      %1062 = vmatpush1.msra.mxu0 %v1023
      %1063 = vmatprep.subr.mxu0 0.0
      %1064 = vmatpush1.msra.mxu0 %v1024
      %1065 = vmatprep.subr.mxu0 0.0
      %1066 = vmatpush1.msra.mxu0 0.0
      %1067 = vmatprep.subr.mxu0 0.0
      %1068 = vmatpush1.msra.mxu0 0.0
      %1069 = vmatprep.subr.mxu0 0.0
      %1070 = vmatpush1.msra.mxu0 0.0
      %1071 = vmatprep.subr.mxu0 0.0
      %1072 = vmatpush1.msra.mxu0 0.0
      %1073 = vmatprep.subr.mxu0 0.0
      %1074 = vmatpush1.msra.mxu0 0.0
      %1075 = vmatprep.subr.mxu0 0.0
      %1076 = vmatpush1.msra.mxu0 0.0
      %1077 = vmatprep.subr.mxu0 0.0
      %1078 = vmatpush1.msra.mxu0 0.0
      %1079 = vmatprep.subr.mxu0 0.0
      %1080 = vmatpush1.msra.mxu0 0.0
      %1081 = vmatprep.subr.mxu0 0.0
      %1082 = vmatpush1.msra.mxu0 0.0
      %1083 = vmatprep.subr.mxu0 0.0
      %1084 = vmatpush1.msra.mxu0 0.0
      %1085 = vmatprep.subr.mxu0 0.0
      %1086 = vmatpush1.msra.mxu0 0.0
      %1087 = vmatprep.subr.mxu0 0.0
      %1088 = vmatpush1.msra.mxu0 0.0
      %1089 = vmatprep.subr.mxu0 0.0
      %1090 = vmatpush1.msra.mxu0 0.0
      %1091 = vmatprep.subr.mxu0 0.0
      %1092 = vmatpush1.msra.mxu0 0.0
      %1093 = vmatprep.subr.mxu0 0.0
      %1094 = vmatpush1.msra.mxu0 0.0
      %1095 = vmatprep.subr.mxu0 0.0
      %1096 = vmatpush1.msra.mxu0 0.0
      %1097 = vmatprep.mubr.f32.mxu0 0.0
      %1098 = vmatmul.mubr.f32.gmra.mrb[0].mxu0 %v992
      %v1099 = vpop.f32.mrb[0].mxu0
      %v1100 = vadd.f32 %v1031, %v1099
      %v1101 = vpop.f32.mrb[0].mxu0
      %1102 = vmatprep.mubr.f32.mxu0 0.0
      %1103 = vmatmul.mubr.f32.gmra.mrb[0].mxu0 %v993
      %v1104 = vpop.f32.mrb[0].mxu0
      %v1105 = vadd.f32 %v1031, %v1104
      %v1106 = vpop.f32.mrb[0].mxu0
      %1107 = vmatprep.mubr.f32.mxu0 0.0
      %1108 = vmatmul.mubr.f32.gmra.mrb[0].mxu0 %v994
      %v1109 = vpop.f32.mrb[0].mxu0
      %v1110 = vadd.f32 %v1031, %v1109
      %v1111 = vpop.f32.mrb[0].mxu0
      %1112 = vmatprep.mubr.f32.mxu0 0.0
      %1113 = vmatmul.mubr.f32.gmra.mrb[0].mxu0 %v995
      %v1114 = vpop.f32.mrb[0].mxu0
      %v1115 = vadd.f32 %v1031, %v1114
      %v1116 = vpop.f32.mrb[0].mxu0
      %1117 = vmatprep.mubr.f32.mxu0 0.0
      %1118 = vmatmul.mubr.f32.gmra.mrb[0].mxu0 %v996
      %v1119 = vpop.f32.mrb[0].mxu0
      %v1120 = vadd.f32 %v1031, %v1119
      %v1121 = vpop.f32.mrb[0].mxu0
      %1122 = vmatprep.mubr.f32.mxu0 0.0
      %1123 = vmatmul.mubr.f32.gmra.mrb[0].mxu0 %v997
      %v1124 = vpop.f32.mrb[0].mxu0
      %v1125 = vadd.f32 %v1031, %v1124
      %v1126 = vpop.f32.mrb[0].mxu0
      %1127 = vmatprep.mubr.f32.mxu0 0.0
      %1128 = vmatmul.mubr.f32.gmra.mrb[0].mxu0 %v998
      %v1129 = vpop.f32.mrb[0].mxu0
      %v1130 = vadd.f32 %v1031, %v1129
      %v1131 = vpop.f32.mrb[0].mxu0
      %1132 = vmatprep.mubr.f32.mxu0 0.0
      %1133 = vmatmul.mubr.f32.gmra.mrb[0].mxu0 %v999
      %v1134 = vpop.f32.mrb[0].mxu0
      %v1135 = vadd.f32 %v1031, %v1134
      %v1136 = vpop.f32.mrb[0].mxu0
      %1137 = vmatprep.mubr.f32.mxu0 0.0
      %1138 = vmatmul.mubr.f32.gmra.mrb[0].mxu0 %v1000
      %v1139 = vpop.f32.mrb[0].mxu0
      %v1140 = vadd.f32 %v1031, %v1139
      %v1141 = vpop.f32.mrb[0].mxu0
      %1142 = vmatprep.mubr.f32.mxu0 0.0
      %1143 = vmatmul.mubr.f32.gmra.mrb[0].mxu0 %v1001
      %v1144 = vpop.f32.mrb[0].mxu0
      %v1145 = vadd.f32 %v1031, %v1144
      %v1146 = vpop.f32.mrb[0].mxu0
      %1147 = vmatprep.mubr.f32.mxu0 0.0
      %1148 = vmatmul.mubr.f32.gmra.mrb[0].mxu0 %v1002
      %v1149 = vpop.f32.mrb[0].mxu0
      %v1150 = vadd.f32 %v1031, %v1149
      %v1151 = vpop.f32.mrb[0].mxu0
      %1152 = vmatprep.mubr.f32.mxu0 0.0
      %1153 = vmatmul.mubr.f32.gmra.mrb[0].mxu0 %v1003
      %v1154 = vpop.f32.mrb[0].mxu0
      %v1155 = vadd.f32 %v1031, %v1154
      %v1156 = vpop.f32.mrb[0].mxu0
      %1157 = vmatprep.mubr.f32.mxu0 0.0
      %1158 = vmatmul.mubr.f32.gmra.mrb[0].mxu0 %v1004
      %v1159 = vpop.f32.mrb[0].mxu0
      %v1160 = vadd.f32 %v1031, %v1159
      %v1161 = vpop.f32.mrb[0].mxu0
      %1162 = vmatprep.mubr.f32.mxu0 0.0
      %1163 = vmatmul.mubr.f32.gmra.mrb[0].mxu0 %v1005
      %v1164 = vpop.f32.mrb[0].mxu0
      %v1165 = vadd.f32 %v1031, %v1164
      %v1166 = vpop.f32.mrb[0].mxu0
      %1167 = vmatprep.mubr.f32.mxu0 0.0
      %1168 = vmatmul.mubr.f32.gmra.mrb[0].mxu0 %v1006
      %v1169 = vpop.f32.mrb[0].mxu0
      %v1170 = vadd.f32 %v1031, %v1169
      %v1171 = vpop.f32.mrb[0].mxu0
      %1172 = vmatprep.mubr.f32.mxu0 0.0
      %1173 = vmatmul.mubr.f32.gmra.mrb[0].mxu0 %v1007
      %v1174 = vpop.f32.mrb[0].mxu0
      %v1175 = vadd.f32 %v1031, %v1174
      %v1176 = vpop.f32.mrb[0].mxu0
      %1177 = vdwg.mxu0
      %s1178 = scalar_lea.vmem %s1, 384
      %v1179 = vld [vmem:[%s1178] sm:$0xff]
      %v1180 = vld [vmem:[%s1178 + $0x8] sm:$0xff]
      %v1181 = vld [vmem:[%s1178 + $0x10] sm:$0xff]
      %v1182 = vld [vmem:[%s1178 + $0x18] sm:$0xff]
      %v1183 = vld [vmem:[%s1178 + $0x20] sm:$0xff]
      %v1184 = vld [vmem:[%s1178 + $0x28] sm:$0xff]
      %v1185 = vld [vmem:[%s1178 + $0x30] sm:$0xff]
      %v1186 = vld [vmem:[%s1178 + $0x38] sm:$0xff]
      %v1187 = vld [vmem:[%s1178 + $0x40] sm:$0xff]
      %v1188 = vld [vmem:[%s1178 + $0x48] sm:$0xff]
      %v1189 = vld [vmem:[%s1178 + $0x50] sm:$0xff]
      %v1190 = vld [vmem:[%s1178 + $0x58] sm:$0xff]
      %v1191 = vld [vmem:[%s1178 + $0x60] sm:$0xff]
      %v1192 = vld [vmem:[%s1178 + $0x68] sm:$0xff]
      %v1193 = vld [vmem:[%s1178 + $0x70] sm:$0xff]
      %v1194 = vld [vmem:[%s1178 + $0x78] sm:$0xff]
      %s1195 = scalar_lea.vmem %s2, 3
      %v1196 = vld [vmem:[%s1195] sm:$0x1]
      %v1198 = vlaneseq
      %v1199 = vshrl.u32 %v1198, 7
      %v1200 = vsub.s32 0, %v1199
      %v1201 = vrot.slane %v1196, %v1200
      %1203 = vmatprep.subr.mxu0 0.0
      %1204 = vmatpush1.msra.mxu0 %v1179
      %1205 = vmatprep.subr.mxu0 0.0
      %1206 = vmatpush1.msra.mxu0 %v1180
      %1207 = vmatprep.subr.mxu0 0.0
      %1208 = vmatpush1.msra.mxu0 %v1181
      %1209 = vmatprep.subr.mxu0 0.0
      %1210 = vmatpush1.msra.mxu0 %v1182
      %1211 = vmatprep.subr.mxu0 0.0
      %1212 = vmatpush1.msra.mxu0 %v1183
      %1213 = vmatprep.subr.mxu0 0.0
      %1214 = vmatpush1.msra.mxu0 %v1184
      %1215 = vmatprep.subr.mxu0 0.0
      %1216 = vmatpush1.msra.mxu0 %v1185
      %1217 = vmatprep.subr.mxu0 0.0
      %1218 = vmatpush1.msra.mxu0 %v1186
      %1219 = vmatprep.subr.mxu0 0.0
      %1220 = vmatpush1.msra.mxu0 %v1187
      %1221 = vmatprep.subr.mxu0 0.0
      %1222 = vmatpush1.msra.mxu0 %v1188
      %1223 = vmatprep.subr.mxu0 0.0
      %1224 = vmatpush1.msra.mxu0 %v1189
      %1225 = vmatprep.subr.mxu0 0.0
      %1226 = vmatpush1.msra.mxu0 %v1190
      %1227 = vmatprep.subr.mxu0 0.0
      %1228 = vmatpush1.msra.mxu0 %v1191
      %1229 = vmatprep.subr.mxu0 0.0
      %1230 = vmatpush1.msra.mxu0 %v1192
      %1231 = vmatprep.subr.mxu0 0.0
      %1232 = vmatpush1.msra.mxu0 %v1193
      %1233 = vmatprep.subr.mxu0 0.0
      %1234 = vmatpush1.msra.mxu0 %v1194
      %1235 = vmatprep.subr.mxu0 0.0
      %1236 = vmatpush1.msra.mxu0 0.0
      %1237 = vmatprep.subr.mxu0 0.0
      %1238 = vmatpush1.msra.mxu0 0.0
      %1239 = vmatprep.subr.mxu0 0.0
      %1240 = vmatpush1.msra.mxu0 0.0
      %1241 = vmatprep.subr.mxu0 0.0
      %1242 = vmatpush1.msra.mxu0 0.0
      %1243 = vmatprep.subr.mxu0 0.0
      %1244 = vmatpush1.msra.mxu0 0.0
      %1245 = vmatprep.subr.mxu0 0.0
      %1246 = vmatpush1.msra.mxu0 0.0
      %1247 = vmatprep.subr.mxu0 0.0
      %1248 = vmatpush1.msra.mxu0 0.0
      %1249 = vmatprep.subr.mxu0 0.0
      %1250 = vmatpush1.msra.mxu0 0.0
      %1251 = vmatprep.subr.mxu0 0.0
      %1252 = vmatpush1.msra.mxu0 0.0
      %1253 = vmatprep.subr.mxu0 0.0
      %1254 = vmatpush1.msra.mxu0 0.0
      %1255 = vmatprep.subr.mxu0 0.0
      %1256 = vmatpush1.msra.mxu0 0.0
      %1257 = vmatprep.subr.mxu0 0.0
      %1258 = vmatpush1.msra.mxu0 0.0
      %1259 = vmatprep.subr.mxu0 0.0
      %1260 = vmatpush1.msra.mxu0 0.0
      %1261 = vmatprep.subr.mxu0 0.0
      %1262 = vmatpush1.msra.mxu0 0.0
      %1263 = vmatprep.subr.mxu0 0.0
      %1264 = vmatpush1.msra.mxu0 0.0
      %1265 = vmatprep.subr.mxu0 0.0
      %1266 = vmatpush1.msra.mxu0 0.0
      %1267 = vmatprep.mubr.f32.mxu0 0.0
      %1268 = vmatmul.mubr.f32.gmra.mrb[0].mxu0 %v1100
      %v1269 = vpop.f32.mrb[0].mxu0
      %v1270 = vadd.f32 %v1201, %v1269
      %v1271 = vpop.f32.mrb[0].mxu0
      %1272 = vmatprep.mubr.f32.mxu0 0.0
      %1273 = vmatmul.mubr.f32.gmra.mrb[0].mxu0 %v1105
      %v1274 = vpop.f32.mrb[0].mxu0
      %v1275 = vadd.f32 %v1201, %v1274
      %v1276 = vpop.f32.mrb[0].mxu0
      %1277 = vmatprep.mubr.f32.mxu0 0.0
      %1278 = vmatmul.mubr.f32.gmra.mrb[0].mxu0 %v1110
      %v1279 = vpop.f32.mrb[0].mxu0
      %v1280 = vadd.f32 %v1201, %v1279
      %v1281 = vpop.f32.mrb[0].mxu0
      %1282 = vmatprep.mubr.f32.mxu0 0.0
      %1283 = vmatmul.mubr.f32.gmra.mrb[0].mxu0 %v1115
      %v1284 = vpop.f32.mrb[0].mxu0
      %v1285 = vadd.f32 %v1201, %v1284
      %v1286 = vpop.f32.mrb[0].mxu0
      %1287 = vmatprep.mubr.f32.mxu0 0.0
      %1288 = vmatmul.mubr.f32.gmra.mrb[0].mxu0 %v1120
      %v1289 = vpop.f32.mrb[0].mxu0
      %v1290 = vadd.f32 %v1201, %v1289
      %v1291 = vpop.f32.mrb[0].mxu0
      %1292 = vmatprep.mubr.f32.mxu0 0.0
      %1293 = vmatmul.mubr.f32.gmra.mrb[0].mxu0 %v1125
      %v1294 = vpop.f32.mrb[0].mxu0
      %v1295 = vadd.f32 %v1201, %v1294
      %v1296 = vpop.f32.mrb[0].mxu0
      %1297 = vmatprep.mubr.f32.mxu0 0.0
      %1298 = vmatmul.mubr.f32.gmra.mrb[0].mxu0 %v1130
      %v1299 = vpop.f32.mrb[0].mxu0
      %v1300 = vadd.f32 %v1201, %v1299
      %v1301 = vpop.f32.mrb[0].mxu0
      %1302 = vmatprep.mubr.f32.mxu0 0.0
      %1303 = vmatmul.mubr.f32.gmra.mrb[0].mxu0 %v1135
      %v1304 = vpop.f32.mrb[0].mxu0
      %v1305 = vadd.f32 %v1201, %v1304
      %v1306 = vpop.f32.mrb[0].mxu0
      %1307 = vmatprep.mubr.f32.mxu0 0.0
      %1308 = vmatmul.mubr.f32.gmra.mrb[0].mxu0 %v1140
      %v1309 = vpop.f32.mrb[0].mxu0
      %v1310 = vadd.f32 %v1201, %v1309
      %v1311 = vpop.f32.mrb[0].mxu0
      %1312 = vmatprep.mubr.f32.mxu0 0.0
      %1313 = vmatmul.mubr.f32.gmra.mrb[0].mxu0 %v1145
      %v1314 = vpop.f32.mrb[0].mxu0
      %v1315 = vadd.f32 %v1201, %v1314
      %v1316 = vpop.f32.mrb[0].mxu0
      %1317 = vmatprep.mubr.f32.mxu0 0.0
      %1318 = vmatmul.mubr.f32.gmra.mrb[0].mxu0 %v1150
      %v1319 = vpop.f32.mrb[0].mxu0
      %v1320 = vadd.f32 %v1201, %v1319
      %v1321 = vpop.f32.mrb[0].mxu0
      %1322 = vmatprep.mubr.f32.mxu0 0.0
      %1323 = vmatmul.mubr.f32.gmra.mrb[0].mxu0 %v1155
      %v1324 = vpop.f32.mrb[0].mxu0
      %v1325 = vadd.f32 %v1201, %v1324
      %v1326 = vpop.f32.mrb[0].mxu0
      %1327 = vmatprep.mubr.f32.mxu0 0.0
      %1328 = vmatmul.mubr.f32.gmra.mrb[0].mxu0 %v1160
      %v1329 = vpop.f32.mrb[0].mxu0
      %v1330 = vadd.f32 %v1201, %v1329
      %v1331 = vpop.f32.mrb[0].mxu0
      %1332 = vmatprep.mubr.f32.mxu0 0.0
      %1333 = vmatmul.mubr.f32.gmra.mrb[0].mxu0 %v1165
      %v1334 = vpop.f32.mrb[0].mxu0
      %v1335 = vadd.f32 %v1201, %v1334
      %v1336 = vpop.f32.mrb[0].mxu0
      %1337 = vmatprep.mubr.f32.mxu0 0.0
      %1338 = vmatmul.mubr.f32.gmra.mrb[0].mxu0 %v1170
      %v1339 = vpop.f32.mrb[0].mxu0
      %v1340 = vadd.f32 %v1201, %v1339
      %v1341 = vpop.f32.mrb[0].mxu0
      %1342 = vmatprep.mubr.f32.mxu0 0.0
      %1343 = vmatmul.mubr.f32.gmra.mrb[0].mxu0 %v1175
      %v1344 = vpop.f32.mrb[0].mxu0
      %v1345 = vadd.f32 %v1201, %v1344
      %v1346 = vpop.f32.mrb[0].mxu0
      %1347 = vdwg.mxu0
      %v1348 = vmax.f32 %v1270, 0.0
      %v1349 = vmax.f32 %v1275, 0.0
      %v1350 = vmax.f32 %v1280, 0.0
      %v1351 = vmax.f32 %v1285, 0.0
      %v1352 = vmax.f32 %v1290, 0.0
      %v1353 = vmax.f32 %v1295, 0.0
      %v1354 = vmax.f32 %v1300, 0.0
      %v1355 = vmax.f32 %v1305, 0.0
      %v1356 = vmax.f32 %v1310, 0.0
      %v1357 = vmax.f32 %v1315, 0.0
      %v1358 = vmax.f32 %v1320, 0.0
      %v1359 = vmax.f32 %v1325, 0.0
      %v1360 = vmax.f32 %v1330, 0.0
      %v1361 = vmax.f32 %v1335, 0.0
      %v1362 = vmax.f32 %v1340, 0.0
      %v1363 = vmax.f32 %v1345, 0.0
      %v1364 = vand.u32 2147483647, %v1270
      %v1365 = vand.u32 2147483647, %v1275
      %v1366 = vand.u32 2147483647, %v1280
      %v1367 = vand.u32 2147483647, %v1285
      %v1368 = vand.u32 2147483647, %v1290
      %v1369 = vand.u32 2147483647, %v1295
      %v1370 = vand.u32 2147483647, %v1300
      %v1371 = vand.u32 2147483647, %v1305
      %v1372 = vand.u32 2147483647, %v1310
      %v1373 = vand.u32 2147483647, %v1315
      %v1374 = vand.u32 2147483647, %v1320
      %v1375 = vand.u32 2147483647, %v1325
      %v1376 = vand.u32 2147483647, %v1330
      %v1377 = vand.u32 2147483647, %v1335
      %v1378 = vand.u32 2147483647, %v1340
      %v1379 = vand.u32 2147483647, %v1345
      %v1380 = vsub.f32 0.0, %v1364
      %v1381 = vsub.f32 0.0, %v1365
      %v1382 = vsub.f32 0.0, %v1366
      %v1383 = vsub.f32 0.0, %v1367
      %v1384 = vsub.f32 0.0, %v1368
      %v1385 = vsub.f32 0.0, %v1369
      %v1386 = vsub.f32 0.0, %v1370
      %v1387 = vsub.f32 0.0, %v1371
      %v1388 = vsub.f32 0.0, %v1372
      %v1389 = vsub.f32 0.0, %v1373
      %v1390 = vsub.f32 0.0, %v1374
      %v1391 = vsub.f32 0.0, %v1375
      %v1392 = vsub.f32 0.0, %v1376
      %v1393 = vsub.f32 0.0, %v1377
      %v1394 = vsub.f32 0.0, %v1378
      %v1395 = vsub.f32 0.0, %v1379
      %v1396 = vmul.f32 %v1380, 1.442695
      %v1397 = vpow.pop %v1396
      %v1398 = vmul.f32 %v1381, 1.442695
      %v1399 = vpow.pop %v1398
      %v1400 = vmul.f32 %v1382, 1.442695
      %v1401 = vpow.pop %v1400
      %v1402 = vmul.f32 %v1383, 1.442695
      %v1403 = vpow.pop %v1402
      %v1404 = vmul.f32 %v1384, 1.442695
      %v1405 = vpow.pop %v1404
      %v1406 = vmul.f32 %v1385, 1.442695
      %v1407 = vpow.pop %v1406
      %v1408 = vmul.f32 %v1386, 1.442695
      %v1409 = vpow.pop %v1408
      %v1410 = vmul.f32 %v1387, 1.442695
      %v1411 = vpow.pop %v1410
      %v1412 = vmul.f32 %v1388, 1.442695
      %v1413 = vpow.pop %v1412
      %v1414 = vmul.f32 %v1389, 1.442695
      %v1415 = vpow.pop %v1414
      %v1416 = vmul.f32 %v1390, 1.442695
      %v1417 = vpow.pop %v1416
      %v1418 = vmul.f32 %v1391, 1.442695
      %v1419 = vpow.pop %v1418
      %v1420 = vmul.f32 %v1392, 1.442695
      %v1421 = vpow.pop %v1420
      %v1422 = vmul.f32 %v1393, 1.442695
      %v1423 = vpow.pop %v1422
      %v1424 = vmul.f32 %v1394, 1.442695
      %v1425 = vpow.pop %v1424
      %v1426 = vmul.f32 %v1395, 1.442695
      %v1427 = vpow.pop %v1426
      %v1428 = vadd.f32 %v1397, 1.0
      %v1429 = vlog2.pop %v1428
      %v1430 = vmul.f32 %v1429, 0.6931472
      %v1431 = vmul.f32 -0.5, %v1397
      %v1432 = vadd.f32 %v1431, 1.0
      %v1433 = vmul.f32 %v1432, %v1397
      %v1434 = vand.u32 2147483647, %v1397
      %vm1435 = vcmp.lt.f32.partialorder %v1434, 0.0004427343
      %v1436 = vsel %vm1435, %v1433, %v1430
      %v1437 = vadd.f32 %v1399, 1.0
      %v1438 = vlog2.pop %v1437
      %v1439 = vmul.f32 %v1438, 0.6931472
      %v1440 = vmul.f32 -0.5, %v1399
      %v1441 = vadd.f32 %v1440, 1.0
      %v1442 = vmul.f32 %v1441, %v1399
      %v1443 = vand.u32 2147483647, %v1399
      %vm1444 = vcmp.lt.f32.partialorder %v1443, 0.0004427343
      %v1445 = vsel %vm1444, %v1442, %v1439
      %v1446 = vadd.f32 %v1401, 1.0
      %v1447 = vlog2.pop %v1446
      %v1448 = vmul.f32 %v1447, 0.6931472
      %v1449 = vmul.f32 -0.5, %v1401
      %v1450 = vadd.f32 %v1449, 1.0
      %v1451 = vmul.f32 %v1450, %v1401
      %v1452 = vand.u32 2147483647, %v1401
      %vm1453 = vcmp.lt.f32.partialorder %v1452, 0.0004427343
      %v1454 = vsel %vm1453, %v1451, %v1448
      %v1455 = vadd.f32 %v1403, 1.0
      %v1456 = vlog2.pop %v1455
      %v1457 = vmul.f32 %v1456, 0.6931472
      %v1458 = vmul.f32 -0.5, %v1403
      %v1459 = vadd.f32 %v1458, 1.0
      %v1460 = vmul.f32 %v1459, %v1403
      %v1461 = vand.u32 2147483647, %v1403
      %vm1462 = vcmp.lt.f32.partialorder %v1461, 0.0004427343
      %v1463 = vsel %vm1462, %v1460, %v1457
      %v1464 = vadd.f32 %v1405, 1.0
      %v1465 = vlog2.pop %v1464
      %v1466 = vmul.f32 %v1465, 0.6931472
      %v1467 = vmul.f32 -0.5, %v1405
      %v1468 = vadd.f32 %v1467, 1.0
      %v1469 = vmul.f32 %v1468, %v1405
      %v1470 = vand.u32 2147483647, %v1405
      %vm1471 = vcmp.lt.f32.partialorder %v1470, 0.0004427343
      %v1472 = vsel %vm1471, %v1469, %v1466
      %v1473 = vadd.f32 %v1407, 1.0
      %v1474 = vlog2.pop %v1473
      %v1475 = vmul.f32 %v1474, 0.6931472
      %v1476 = vmul.f32 -0.5, %v1407
      %v1477 = vadd.f32 %v1476, 1.0
      %v1478 = vmul.f32 %v1477, %v1407
      %v1479 = vand.u32 2147483647, %v1407
      %vm1480 = vcmp.lt.f32.partialorder %v1479, 0.0004427343
      %v1481 = vsel %vm1480, %v1478, %v1475
      %v1482 = vadd.f32 %v1409, 1.0
      %v1483 = vlog2.pop %v1482
      %v1484 = vmul.f32 %v1483, 0.6931472
      %v1485 = vmul.f32 -0.5, %v1409
      %v1486 = vadd.f32 %v1485, 1.0
      %v1487 = vmul.f32 %v1486, %v1409
      %v1488 = vand.u32 2147483647, %v1409
      %vm1489 = vcmp.lt.f32.partialorder %v1488, 0.0004427343
      %v1490 = vsel %vm1489, %v1487, %v1484
      %v1491 = vadd.f32 %v1411, 1.0
      %v1492 = vlog2.pop %v1491
      %v1493 = vmul.f32 %v1492, 0.6931472
      %v1494 = vmul.f32 -0.5, %v1411
      %v1495 = vadd.f32 %v1494, 1.0
      %v1496 = vmul.f32 %v1495, %v1411
      %v1497 = vand.u32 2147483647, %v1411
      %vm1498 = vcmp.lt.f32.partialorder %v1497, 0.0004427343
      %v1499 = vsel %vm1498, %v1496, %v1493
      %v1500 = vadd.f32 %v1413, 1.0
      %v1501 = vlog2.pop %v1500
      %v1502 = vmul.f32 %v1501, 0.6931472
      %v1503 = vmul.f32 -0.5, %v1413
      %v1504 = vadd.f32 %v1503, 1.0
      %v1505 = vmul.f32 %v1504, %v1413
      %v1506 = vand.u32 2147483647, %v1413
      %vm1507 = vcmp.lt.f32.partialorder %v1506, 0.0004427343
      %v1508 = vsel %vm1507, %v1505, %v1502
      %v1509 = vadd.f32 %v1415, 1.0
      %v1510 = vlog2.pop %v1509
      %v1511 = vmul.f32 %v1510, 0.6931472
      %v1512 = vmul.f32 -0.5, %v1415
      %v1513 = vadd.f32 %v1512, 1.0
      %v1514 = vmul.f32 %v1513, %v1415
      %v1515 = vand.u32 2147483647, %v1415
      %vm1516 = vcmp.lt.f32.partialorder %v1515, 0.0004427343
      %v1517 = vsel %vm1516, %v1514, %v1511
      %v1518 = vadd.f32 %v1417, 1.0
      %v1519 = vlog2.pop %v1518
      %v1520 = vmul.f32 %v1519, 0.6931472
      %v1521 = vmul.f32 -0.5, %v1417
      %v1522 = vadd.f32 %v1521, 1.0
      %v1523 = vmul.f32 %v1522, %v1417
      %v1524 = vand.u32 2147483647, %v1417
      %vm1525 = vcmp.lt.f32.partialorder %v1524, 0.0004427343
      %v1526 = vsel %vm1525, %v1523, %v1520
      %v1527 = vadd.f32 %v1419, 1.0
      %v1528 = vlog2.pop %v1527
      %v1529 = vmul.f32 %v1528, 0.6931472
      %v1530 = vmul.f32 -0.5, %v1419
      %v1531 = vadd.f32 %v1530, 1.0
      %v1532 = vmul.f32 %v1531, %v1419
      %v1533 = vand.u32 2147483647, %v1419
      %vm1534 = vcmp.lt.f32.partialorder %v1533, 0.0004427343
      %v1535 = vsel %vm1534, %v1532, %v1529
      %v1536 = vadd.f32 %v1421, 1.0
      %v1537 = vlog2.pop %v1536
      %v1538 = vmul.f32 %v1537, 0.6931472
      %v1539 = vmul.f32 -0.5, %v1421
      %v1540 = vadd.f32 %v1539, 1.0
      %v1541 = vmul.f32 %v1540, %v1421
      %v1542 = vand.u32 2147483647, %v1421
      %vm1543 = vcmp.lt.f32.partialorder %v1542, 0.0004427343
      %v1544 = vsel %vm1543, %v1541, %v1538
      %v1545 = vadd.f32 %v1423, 1.0
      %v1546 = vlog2.pop %v1545
      %v1547 = vmul.f32 %v1546, 0.6931472
      %v1548 = vmul.f32 -0.5, %v1423
      %v1549 = vadd.f32 %v1548, 1.0
      %v1550 = vmul.f32 %v1549, %v1423
      %v1551 = vand.u32 2147483647, %v1423
      %vm1552 = vcmp.lt.f32.partialorder %v1551, 0.0004427343
      %v1553 = vsel %vm1552, %v1550, %v1547
      %v1554 = vadd.f32 %v1425, 1.0
      %v1555 = vlog2.pop %v1554
      %v1556 = vmul.f32 %v1555, 0.6931472
      %v1557 = vmul.f32 -0.5, %v1425
      %v1558 = vadd.f32 %v1557, 1.0
      %v1559 = vmul.f32 %v1558, %v1425
      %v1560 = vand.u32 2147483647, %v1425
      %vm1561 = vcmp.lt.f32.partialorder %v1560, 0.0004427343
      %v1562 = vsel %vm1561, %v1559, %v1556
      %v1563 = vadd.f32 %v1427, 1.0
      %v1564 = vlog2.pop %v1563
      %v1565 = vmul.f32 %v1564, 0.6931472
      %v1566 = vmul.f32 -0.5, %v1427
      %v1567 = vadd.f32 %v1566, 1.0
      %v1568 = vmul.f32 %v1567, %v1427
      %v1569 = vand.u32 2147483647, %v1427
      %vm1570 = vcmp.lt.f32.partialorder %v1569, 0.0004427343
      %v1571 = vsel %vm1570, %v1568, %v1565
      %v1572 = vadd.f32 %v1348, %v1436
      %v1573 = vadd.f32 %v1349, %v1445
      %v1574 = vadd.f32 %v1350, %v1454
      %v1575 = vadd.f32 %v1351, %v1463
      %v1576 = vadd.f32 %v1352, %v1472
      %v1577 = vadd.f32 %v1353, %v1481
      %v1578 = vadd.f32 %v1354, %v1490
      %v1579 = vadd.f32 %v1355, %v1499
      %v1580 = vadd.f32 %v1356, %v1508
      %v1581 = vadd.f32 %v1357, %v1517
      %v1582 = vadd.f32 %v1358, %v1526
      %v1583 = vadd.f32 %v1359, %v1535
      %v1584 = vadd.f32 %v1360, %v1544
      %v1585 = vadd.f32 %v1361, %v1553
      %v1586 = vadd.f32 %v1362, %v1562
      %v1587 = vadd.f32 %v1363, %v1571
      %s1588 = scalar_lea.vmem %s1, 512
      %v1589 = vld [vmem:[%s1588] sm:$0xff]
      %v1590 = vld [vmem:[%s1588 + $0x8] sm:$0xff]
      %v1591 = vld [vmem:[%s1588 + $0x10] sm:$0xff]
      %v1592 = vld [vmem:[%s1588 + $0x18] sm:$0xff]
      %v1593 = vld [vmem:[%s1588 + $0x20] sm:$0xff]
      %v1594 = vld [vmem:[%s1588 + $0x28] sm:$0xff]
      %v1595 = vld [vmem:[%s1588 + $0x30] sm:$0xff]
      %v1596 = vld [vmem:[%s1588 + $0x38] sm:$0xff]
      %v1597 = vld [vmem:[%s1588 + $0x40] sm:$0xff]
      %v1598 = vld [vmem:[%s1588 + $0x48] sm:$0xff]
      %v1599 = vld [vmem:[%s1588 + $0x50] sm:$0xff]
      %v1600 = vld [vmem:[%s1588 + $0x58] sm:$0xff]
      %v1601 = vld [vmem:[%s1588 + $0x60] sm:$0xff]
      %v1602 = vld [vmem:[%s1588 + $0x68] sm:$0xff]
      %v1603 = vld [vmem:[%s1588 + $0x70] sm:$0xff]
      %v1604 = vld [vmem:[%s1588 + $0x78] sm:$0xff]
      %s1605 = scalar_lea.vmem %s2, 4
      %v1606 = vld [vmem:[%s1605] sm:$0x1]
      %v1608 = vlaneseq
      %v1609 = vshrl.u32 %v1608, 7
      %v1610 = vsub.s32 0, %v1609
      %v1611 = vrot.slane %v1606, %v1610
      %1613 = vmatprep.subr.mxu0 0.0
      %1614 = vmatpush1.msra.mxu0 %v1589
      %1615 = vmatprep.subr.mxu0 0.0
      %1616 = vmatpush1.msra.mxu0 %v1590
      %1617 = vmatprep.subr.mxu0 0.0
      %1618 = vmatpush1.msra.mxu0 %v1591
      %1619 = vmatprep.subr.mxu0 0.0
      %1620 = vmatpush1.msra.mxu0 %v1592
      %1621 = vmatprep.subr.mxu0 0.0
      %1622 = vmatpush1.msra.mxu0 %v1593
      %1623 = vmatprep.subr.mxu0 0.0
      %1624 = vmatpush1.msra.mxu0 %v1594
      %1625 = vmatprep.subr.mxu0 0.0
      %1626 = vmatpush1.msra.mxu0 %v1595
      %1627 = vmatprep.subr.mxu0 0.0
      %1628 = vmatpush1.msra.mxu0 %v1596
      %1629 = vmatprep.subr.mxu0 0.0
      %1630 = vmatpush1.msra.mxu0 %v1597
      %1631 = vmatprep.subr.mxu0 0.0
      %1632 = vmatpush1.msra.mxu0 %v1598
      %1633 = vmatprep.subr.mxu0 0.0
      %1634 = vmatpush1.msra.mxu0 %v1599
      %1635 = vmatprep.subr.mxu0 0.0
      %1636 = vmatpush1.msra.mxu0 %v1600
      %1637 = vmatprep.subr.mxu0 0.0
      %1638 = vmatpush1.msra.mxu0 %v1601
      %1639 = vmatprep.subr.mxu0 0.0
      %1640 = vmatpush1.msra.mxu0 %v1602
      %1641 = vmatprep.subr.mxu0 0.0
      %1642 = vmatpush1.msra.mxu0 %v1603
      %1643 = vmatprep.subr.mxu0 0.0
      %1644 = vmatpush1.msra.mxu0 %v1604
      %1645 = vmatprep.subr.mxu0 0.0
      %1646 = vmatpush1.msra.mxu0 0.0
      %1647 = vmatprep.subr.mxu0 0.0
      %1648 = vmatpush1.msra.mxu0 0.0
      %1649 = vmatprep.subr.mxu0 0.0
      %1650 = vmatpush1.msra.mxu0 0.0
      %1651 = vmatprep.subr.mxu0 0.0
      %1652 = vmatpush1.msra.mxu0 0.0
      %1653 = vmatprep.subr.mxu0 0.0
      %1654 = vmatpush1.msra.mxu0 0.0
      %1655 = vmatprep.subr.mxu0 0.0
      %1656 = vmatpush1.msra.mxu0 0.0
      %1657 = vmatprep.subr.mxu0 0.0
      %1658 = vmatpush1.msra.mxu0 0.0
      %1659 = vmatprep.subr.mxu0 0.0
      %1660 = vmatpush1.msra.mxu0 0.0
      %1661 = vmatprep.subr.mxu0 0.0
      %1662 = vmatpush1.msra.mxu0 0.0
      %1663 = vmatprep.subr.mxu0 0.0
      %1664 = vmatpush1.msra.mxu0 0.0
      %1665 = vmatprep.subr.mxu0 0.0
      %1666 = vmatpush1.msra.mxu0 0.0
      %1667 = vmatprep.subr.mxu0 0.0
      %1668 = vmatpush1.msra.mxu0 0.0
      %1669 = vmatprep.subr.mxu0 0.0
      %1670 = vmatpush1.msra.mxu0 0.0
      %1671 = vmatprep.subr.mxu0 0.0
      %1672 = vmatpush1.msra.mxu0 0.0
      %1673 = vmatprep.subr.mxu0 0.0
      %1674 = vmatpush1.msra.mxu0 0.0
      %1675 = vmatprep.subr.mxu0 0.0
      %1676 = vmatpush1.msra.mxu0 0.0
      %1677 = vmatprep.mubr.f32.mxu0 0.0
      %1678 = vmatmul.mubr.f32.gmra.mrb[0].mxu0 %v1572
      %v1679 = vpop.f32.mrb[0].mxu0
      %v1680 = vadd.f32 %v1611, %v1679
      %v1681 = vpop.f32.mrb[0].mxu0
      %1682 = vmatprep.mubr.f32.mxu0 0.0
      %1683 = vmatmul.mubr.f32.gmra.mrb[0].mxu0 %v1573
      %v1684 = vpop.f32.mrb[0].mxu0
      %v1685 = vadd.f32 %v1611, %v1684
      %v1686 = vpop.f32.mrb[0].mxu0
      %1687 = vmatprep.mubr.f32.mxu0 0.0
      %1688 = vmatmul.mubr.f32.gmra.mrb[0].mxu0 %v1574
      %v1689 = vpop.f32.mrb[0].mxu0
      %v1690 = vadd.f32 %v1611, %v1689
      %v1691 = vpop.f32.mrb[0].mxu0
      %1692 = vmatprep.mubr.f32.mxu0 0.0
      %1693 = vmatmul.mubr.f32.gmra.mrb[0].mxu0 %v1575
      %v1694 = vpop.f32.mrb[0].mxu0
      %v1695 = vadd.f32 %v1611, %v1694
      %v1696 = vpop.f32.mrb[0].mxu0
      %1697 = vmatprep.mubr.f32.mxu0 0.0
      %1698 = vmatmul.mubr.f32.gmra.mrb[0].mxu0 %v1576
      %v1699 = vpop.f32.mrb[0].mxu0
      %v1700 = vadd.f32 %v1611, %v1699
      %v1701 = vpop.f32.mrb[0].mxu0
      %1702 = vmatprep.mubr.f32.mxu0 0.0
      %1703 = vmatmul.mubr.f32.gmra.mrb[0].mxu0 %v1577
      %v1704 = vpop.f32.mrb[0].mxu0
      %v1705 = vadd.f32 %v1611, %v1704
      %v1706 = vpop.f32.mrb[0].mxu0
      %1707 = vmatprep.mubr.f32.mxu0 0.0
      %1708 = vmatmul.mubr.f32.gmra.mrb[0].mxu0 %v1578
      %v1709 = vpop.f32.mrb[0].mxu0
      %v1710 = vadd.f32 %v1611, %v1709
      %v1711 = vpop.f32.mrb[0].mxu0
      %1712 = vmatprep.mubr.f32.mxu0 0.0
      %1713 = vmatmul.mubr.f32.gmra.mrb[0].mxu0 %v1579
      %v1714 = vpop.f32.mrb[0].mxu0
      %v1715 = vadd.f32 %v1611, %v1714
      %v1716 = vpop.f32.mrb[0].mxu0
      %1717 = vmatprep.mubr.f32.mxu0 0.0
      %1718 = vmatmul.mubr.f32.gmra.mrb[0].mxu0 %v1580
      %v1719 = vpop.f32.mrb[0].mxu0
      %v1720 = vadd.f32 %v1611, %v1719
      %v1721 = vpop.f32.mrb[0].mxu0
      %1722 = vmatprep.mubr.f32.mxu0 0.0
      %1723 = vmatmul.mubr.f32.gmra.mrb[0].mxu0 %v1581
      %v1724 = vpop.f32.mrb[0].mxu0
      %v1725 = vadd.f32 %v1611, %v1724
      %v1726 = vpop.f32.mrb[0].mxu0
      %1727 = vmatprep.mubr.f32.mxu0 0.0
      %1728 = vmatmul.mubr.f32.gmra.mrb[0].mxu0 %v1582
      %v1729 = vpop.f32.mrb[0].mxu0
      %v1730 = vadd.f32 %v1611, %v1729
      %v1731 = vpop.f32.mrb[0].mxu0
      %1732 = vmatprep.mubr.f32.mxu0 0.0
      %1733 = vmatmul.mubr.f32.gmra.mrb[0].mxu0 %v1583
      %v1734 = vpop.f32.mrb[0].mxu0
      %v1735 = vadd.f32 %v1611, %v1734
      %v1736 = vpop.f32.mrb[0].mxu0
      %1737 = vmatprep.mubr.f32.mxu0 0.0
      %1738 = vmatmul.mubr.f32.gmra.mrb[0].mxu0 %v1584
      %v1739 = vpop.f32.mrb[0].mxu0
      %v1740 = vadd.f32 %v1611, %v1739
      %v1741 = vpop.f32.mrb[0].mxu0
      %1742 = vmatprep.mubr.f32.mxu0 0.0
      %1743 = vmatmul.mubr.f32.gmra.mrb[0].mxu0 %v1585
      %v1744 = vpop.f32.mrb[0].mxu0
      %v1745 = vadd.f32 %v1611, %v1744
      %v1746 = vpop.f32.mrb[0].mxu0
      %1747 = vmatprep.mubr.f32.mxu0 0.0
      %1748 = vmatmul.mubr.f32.gmra.mrb[0].mxu0 %v1586
      %v1749 = vpop.f32.mrb[0].mxu0
      %v1750 = vadd.f32 %v1611, %v1749
      %v1751 = vpop.f32.mrb[0].mxu0
      %1752 = vmatprep.mubr.f32.mxu0 0.0
      %1753 = vmatmul.mubr.f32.gmra.mrb[0].mxu0 %v1587
      %v1754 = vpop.f32.mrb[0].mxu0
      %v1755 = vadd.f32 %v1611, %v1754
      %v1756 = vpop.f32.mrb[0].mxu0
      %1757 = vdwg.mxu0
      %v1758 = vmax.f32 %v1680, 0.0
      %v1759 = vmax.f32 %v1685, 0.0
      %v1760 = vmax.f32 %v1690, 0.0
      %v1761 = vmax.f32 %v1695, 0.0
      %v1762 = vmax.f32 %v1700, 0.0
      %v1763 = vmax.f32 %v1705, 0.0
      %v1764 = vmax.f32 %v1710, 0.0
      %v1765 = vmax.f32 %v1715, 0.0
      %v1766 = vmax.f32 %v1720, 0.0
      %v1767 = vmax.f32 %v1725, 0.0
      %v1768 = vmax.f32 %v1730, 0.0
      %v1769 = vmax.f32 %v1735, 0.0
      %v1770 = vmax.f32 %v1740, 0.0
      %v1771 = vmax.f32 %v1745, 0.0
      %v1772 = vmax.f32 %v1750, 0.0
      %v1773 = vmax.f32 %v1755, 0.0
      %v1774 = vand.u32 2147483647, %v1680
      %v1775 = vand.u32 2147483647, %v1685
      %v1776 = vand.u32 2147483647, %v1690
      %v1777 = vand.u32 2147483647, %v1695
      %v1778 = vand.u32 2147483647, %v1700
      %v1779 = vand.u32 2147483647, %v1705
      %v1780 = vand.u32 2147483647, %v1710
      %v1781 = vand.u32 2147483647, %v1715
      %v1782 = vand.u32 2147483647, %v1720
      %v1783 = vand.u32 2147483647, %v1725
      %v1784 = vand.u32 2147483647, %v1730
      %v1785 = vand.u32 2147483647, %v1735
      %v1786 = vand.u32 2147483647, %v1740
      %v1787 = vand.u32 2147483647, %v1745
      %v1788 = vand.u32 2147483647, %v1750
      %v1789 = vand.u32 2147483647, %v1755
      %v1790 = vsub.f32 0.0, %v1774
      %v1791 = vsub.f32 0.0, %v1775
      %v1792 = vsub.f32 0.0, %v1776
      %v1793 = vsub.f32 0.0, %v1777
      %v1794 = vsub.f32 0.0, %v1778
      %v1795 = vsub.f32 0.0, %v1779
      %v1796 = vsub.f32 0.0, %v1780
      %v1797 = vsub.f32 0.0, %v1781
      %v1798 = vsub.f32 0.0, %v1782
      %v1799 = vsub.f32 0.0, %v1783
      %v1800 = vsub.f32 0.0, %v1784
      %v1801 = vsub.f32 0.0, %v1785
      %v1802 = vsub.f32 0.0, %v1786
      %v1803 = vsub.f32 0.0, %v1787
      %v1804 = vsub.f32 0.0, %v1788
      %v1805 = vsub.f32 0.0, %v1789
      %v1806 = vmul.f32 %v1790, 1.442695
      %v1807 = vpow.pop %v1806
      %v1808 = vmul.f32 %v1791, 1.442695
      %v1809 = vpow.pop %v1808
      %v1810 = vmul.f32 %v1792, 1.442695
      %v1811 = vpow.pop %v1810
      %v1812 = vmul.f32 %v1793, 1.442695
      %v1813 = vpow.pop %v1812
      %v1814 = vmul.f32 %v1794, 1.442695
      %v1815 = vpow.pop %v1814
      %v1816 = vmul.f32 %v1795, 1.442695
      %v1817 = vpow.pop %v1816
      %v1818 = vmul.f32 %v1796, 1.442695
      %v1819 = vpow.pop %v1818
      %v1820 = vmul.f32 %v1797, 1.442695
      %v1821 = vpow.pop %v1820
      %v1822 = vmul.f32 %v1798, 1.442695
      %v1823 = vpow.pop %v1822
      %v1824 = vmul.f32 %v1799, 1.442695
      %v1825 = vpow.pop %v1824
      %v1826 = vmul.f32 %v1800, 1.442695
      %v1827 = vpow.pop %v1826
      %v1828 = vmul.f32 %v1801, 1.442695
      %v1829 = vpow.pop %v1828
      %v1830 = vmul.f32 %v1802, 1.442695
      %v1831 = vpow.pop %v1830
      %v1832 = vmul.f32 %v1803, 1.442695
      %v1833 = vpow.pop %v1832
      %v1834 = vmul.f32 %v1804, 1.442695
      %v1835 = vpow.pop %v1834
      %v1836 = vmul.f32 %v1805, 1.442695
      %v1837 = vpow.pop %v1836
      %v1838 = vadd.f32 %v1807, 1.0
      %v1839 = vlog2.pop %v1838
      %v1840 = vmul.f32 %v1839, 0.6931472
      %v1841 = vmul.f32 -0.5, %v1807
      %v1842 = vadd.f32 %v1841, 1.0
      %v1843 = vmul.f32 %v1842, %v1807
      %v1844 = vand.u32 2147483647, %v1807
      %vm1845 = vcmp.lt.f32.partialorder %v1844, 0.0004427343
      %v1846 = vsel %vm1845, %v1843, %v1840
      %v1847 = vadd.f32 %v1809, 1.0
      %v1848 = vlog2.pop %v1847
      %v1849 = vmul.f32 %v1848, 0.6931472
      %v1850 = vmul.f32 -0.5, %v1809
      %v1851 = vadd.f32 %v1850, 1.0
      %v1852 = vmul.f32 %v1851, %v1809
      %v1853 = vand.u32 2147483647, %v1809
      %vm1854 = vcmp.lt.f32.partialorder %v1853, 0.0004427343
      %v1855 = vsel %vm1854, %v1852, %v1849
      %v1856 = vadd.f32 %v1811, 1.0
      %v1857 = vlog2.pop %v1856
      %v1858 = vmul.f32 %v1857, 0.6931472
      %v1859 = vmul.f32 -0.5, %v1811
      %v1860 = vadd.f32 %v1859, 1.0
      %v1861 = vmul.f32 %v1860, %v1811
      %v1862 = vand.u32 2147483647, %v1811
      %vm1863 = vcmp.lt.f32.partialorder %v1862, 0.0004427343
      %v1864 = vsel %vm1863, %v1861, %v1858
      %v1865 = vadd.f32 %v1813, 1.0
      %v1866 = vlog2.pop %v1865
      %v1867 = vmul.f32 %v1866, 0.6931472
      %v1868 = vmul.f32 -0.5, %v1813
      %v1869 = vadd.f32 %v1868, 1.0
      %v1870 = vmul.f32 %v1869, %v1813
      %v1871 = vand.u32 2147483647, %v1813
      %vm1872 = vcmp.lt.f32.partialorder %v1871, 0.0004427343
      %v1873 = vsel %vm1872, %v1870, %v1867
      %v1874 = vadd.f32 %v1815, 1.0
      %v1875 = vlog2.pop %v1874
      %v1876 = vmul.f32 %v1875, 0.6931472
      %v1877 = vmul.f32 -0.5, %v1815
      %v1878 = vadd.f32 %v1877, 1.0
      %v1879 = vmul.f32 %v1878, %v1815
      %v1880 = vand.u32 2147483647, %v1815
      %vm1881 = vcmp.lt.f32.partialorder %v1880, 0.0004427343
      %v1882 = vsel %vm1881, %v1879, %v1876
      %v1883 = vadd.f32 %v1817, 1.0
      %v1884 = vlog2.pop %v1883
      %v1885 = vmul.f32 %v1884, 0.6931472
      %v1886 = vmul.f32 -0.5, %v1817
      %v1887 = vadd.f32 %v1886, 1.0
      %v1888 = vmul.f32 %v1887, %v1817
      %v1889 = vand.u32 2147483647, %v1817
      %vm1890 = vcmp.lt.f32.partialorder %v1889, 0.0004427343
      %v1891 = vsel %vm1890, %v1888, %v1885
      %v1892 = vadd.f32 %v1819, 1.0
      %v1893 = vlog2.pop %v1892
      %v1894 = vmul.f32 %v1893, 0.6931472
      %v1895 = vmul.f32 -0.5, %v1819
      %v1896 = vadd.f32 %v1895, 1.0
      %v1897 = vmul.f32 %v1896, %v1819
      %v1898 = vand.u32 2147483647, %v1819
      %vm1899 = vcmp.lt.f32.partialorder %v1898, 0.0004427343
      %v1900 = vsel %vm1899, %v1897, %v1894
      %v1901 = vadd.f32 %v1821, 1.0
      %v1902 = vlog2.pop %v1901
      %v1903 = vmul.f32 %v1902, 0.6931472
      %v1904 = vmul.f32 -0.5, %v1821
      %v1905 = vadd.f32 %v1904, 1.0
      %v1906 = vmul.f32 %v1905, %v1821
      %v1907 = vand.u32 2147483647, %v1821
      %vm1908 = vcmp.lt.f32.partialorder %v1907, 0.0004427343
      %v1909 = vsel %vm1908, %v1906, %v1903
      %v1910 = vadd.f32 %v1823, 1.0
      %v1911 = vlog2.pop %v1910
      %v1912 = vmul.f32 %v1911, 0.6931472
      %v1913 = vmul.f32 -0.5, %v1823
      %v1914 = vadd.f32 %v1913, 1.0
      %v1915 = vmul.f32 %v1914, %v1823
      %v1916 = vand.u32 2147483647, %v1823
      %vm1917 = vcmp.lt.f32.partialorder %v1916, 0.0004427343
      %v1918 = vsel %vm1917, %v1915, %v1912
      %v1919 = vadd.f32 %v1825, 1.0
      %v1920 = vlog2.pop %v1919
      %v1921 = vmul.f32 %v1920, 0.6931472
      %v1922 = vmul.f32 -0.5, %v1825
      %v1923 = vadd.f32 %v1922, 1.0
      %v1924 = vmul.f32 %v1923, %v1825
      %v1925 = vand.u32 2147483647, %v1825
      %vm1926 = vcmp.lt.f32.partialorder %v1925, 0.0004427343
      %v1927 = vsel %vm1926, %v1924, %v1921
      %v1928 = vadd.f32 %v1827, 1.0
      %v1929 = vlog2.pop %v1928
      %v1930 = vmul.f32 %v1929, 0.6931472
      %v1931 = vmul.f32 -0.5, %v1827
      %v1932 = vadd.f32 %v1931, 1.0
      %v1933 = vmul.f32 %v1932, %v1827
      %v1934 = vand.u32 2147483647, %v1827
      %vm1935 = vcmp.lt.f32.partialorder %v1934, 0.0004427343
      %v1936 = vsel %vm1935, %v1933, %v1930
      %v1937 = vadd.f32 %v1829, 1.0
      %v1938 = vlog2.pop %v1937
      %v1939 = vmul.f32 %v1938, 0.6931472
      %v1940 = vmul.f32 -0.5, %v1829
      %v1941 = vadd.f32 %v1940, 1.0
      %v1942 = vmul.f32 %v1941, %v1829
      %v1943 = vand.u32 2147483647, %v1829
      %vm1944 = vcmp.lt.f32.partialorder %v1943, 0.0004427343
      %v1945 = vsel %vm1944, %v1942, %v1939
      %v1946 = vadd.f32 %v1831, 1.0
      %v1947 = vlog2.pop %v1946
      %v1948 = vmul.f32 %v1947, 0.6931472
      %v1949 = vmul.f32 -0.5, %v1831
      %v1950 = vadd.f32 %v1949, 1.0
      %v1951 = vmul.f32 %v1950, %v1831
      %v1952 = vand.u32 2147483647, %v1831
      %vm1953 = vcmp.lt.f32.partialorder %v1952, 0.0004427343
      %v1954 = vsel %vm1953, %v1951, %v1948
      %v1955 = vadd.f32 %v1833, 1.0
      %v1956 = vlog2.pop %v1955
      %v1957 = vmul.f32 %v1956, 0.6931472
      %v1958 = vmul.f32 -0.5, %v1833
      %v1959 = vadd.f32 %v1958, 1.0
      %v1960 = vmul.f32 %v1959, %v1833
      %v1961 = vand.u32 2147483647, %v1833
      %vm1962 = vcmp.lt.f32.partialorder %v1961, 0.0004427343
      %v1963 = vsel %vm1962, %v1960, %v1957
      %v1964 = vadd.f32 %v1835, 1.0
      %v1965 = vlog2.pop %v1964
      %v1966 = vmul.f32 %v1965, 0.6931472
      %v1967 = vmul.f32 -0.5, %v1835
      %v1968 = vadd.f32 %v1967, 1.0
      %v1969 = vmul.f32 %v1968, %v1835
      %v1970 = vand.u32 2147483647, %v1835
      %vm1971 = vcmp.lt.f32.partialorder %v1970, 0.0004427343
      %v1972 = vsel %vm1971, %v1969, %v1966
      %v1973 = vadd.f32 %v1837, 1.0
      %v1974 = vlog2.pop %v1973
      %v1975 = vmul.f32 %v1974, 0.6931472
      %v1976 = vmul.f32 -0.5, %v1837
      %v1977 = vadd.f32 %v1976, 1.0
      %v1978 = vmul.f32 %v1977, %v1837
      %v1979 = vand.u32 2147483647, %v1837
      %vm1980 = vcmp.lt.f32.partialorder %v1979, 0.0004427343
      %v1981 = vsel %vm1980, %v1978, %v1975
      %v1982 = vadd.f32 %v1758, %v1846
      %v1983 = vadd.f32 %v1759, %v1855
      %v1984 = vadd.f32 %v1760, %v1864
      %v1985 = vadd.f32 %v1761, %v1873
      %v1986 = vadd.f32 %v1762, %v1882
      %v1987 = vadd.f32 %v1763, %v1891
      %v1988 = vadd.f32 %v1764, %v1900
      %v1989 = vadd.f32 %v1765, %v1909
      %v1990 = vadd.f32 %v1766, %v1918
      %v1991 = vadd.f32 %v1767, %v1927
      %v1992 = vadd.f32 %v1768, %v1936
      %v1993 = vadd.f32 %v1769, %v1945
      %v1994 = vadd.f32 %v1770, %v1954
      %v1995 = vadd.f32 %v1771, %v1963
      %v1996 = vadd.f32 %v1772, %v1972
      %v1997 = vadd.f32 %v1773, %v1981
      %s1998 = scalar_lea.vmem %s1, 640
      %v1999 = vld [vmem:[%s1998] sm:$0xff]
      %v2000 = vld [vmem:[%s1998 + $0x8] sm:$0xff]
      %v2001 = vld [vmem:[%s1998 + $0x10] sm:$0xff]
      %v2002 = vld [vmem:[%s1998 + $0x18] sm:$0xff]
      %v2003 = vld [vmem:[%s1998 + $0x20] sm:$0xff]
      %v2004 = vld [vmem:[%s1998 + $0x28] sm:$0xff]
      %v2005 = vld [vmem:[%s1998 + $0x30] sm:$0xff]
      %v2006 = vld [vmem:[%s1998 + $0x38] sm:$0xff]
      %v2007 = vld [vmem:[%s1998 + $0x40] sm:$0xff]
      %v2008 = vld [vmem:[%s1998 + $0x48] sm:$0xff]
      %v2009 = vld [vmem:[%s1998 + $0x50] sm:$0xff]
      %v2010 = vld [vmem:[%s1998 + $0x58] sm:$0xff]
      %v2011 = vld [vmem:[%s1998 + $0x60] sm:$0xff]
      %v2012 = vld [vmem:[%s1998 + $0x68] sm:$0xff]
      %v2013 = vld [vmem:[%s1998 + $0x70] sm:$0xff]
      %v2014 = vld [vmem:[%s1998 + $0x78] sm:$0xff]
      %s2015 = scalar_lea.vmem %s2, 5
      %v2016 = vld [vmem:[%s2015] sm:$0x1]
      %v2018 = vlaneseq
      %v2019 = vshrl.u32 %v2018, 7
      %v2020 = vsub.s32 0, %v2019
      %v2021 = vrot.slane %v2016, %v2020
      %2023 = vmatprep.subr.mxu0 0.0
      %2024 = vmatpush1.msra.mxu0 %v1999
      %2025 = vmatprep.subr.mxu0 0.0
      %2026 = vmatpush1.msra.mxu0 %v2000
      %2027 = vmatprep.subr.mxu0 0.0
      %2028 = vmatpush1.msra.mxu0 %v2001
      %2029 = vmatprep.subr.mxu0 0.0
      %2030 = vmatpush1.msra.mxu0 %v2002
      %2031 = vmatprep.subr.mxu0 0.0
      %2032 = vmatpush1.msra.mxu0 %v2003
      %2033 = vmatprep.subr.mxu0 0.0
      %2034 = vmatpush1.msra.mxu0 %v2004
      %2035 = vmatprep.subr.mxu0 0.0
      %2036 = vmatpush1.msra.mxu0 %v2005
      %2037 = vmatprep.subr.mxu0 0.0
      %2038 = vmatpush1.msra.mxu0 %v2006
      %2039 = vmatprep.subr.mxu0 0.0
      %2040 = vmatpush1.msra.mxu0 %v2007
      %2041 = vmatprep.subr.mxu0 0.0
      %2042 = vmatpush1.msra.mxu0 %v2008
      %2043 = vmatprep.subr.mxu0 0.0
      %2044 = vmatpush1.msra.mxu0 %v2009
      %2045 = vmatprep.subr.mxu0 0.0
      %2046 = vmatpush1.msra.mxu0 %v2010
      %2047 = vmatprep.subr.mxu0 0.0
      %2048 = vmatpush1.msra.mxu0 %v2011
      %2049 = vmatprep.subr.mxu0 0.0
      %2050 = vmatpush1.msra.mxu0 %v2012
      %2051 = vmatprep.subr.mxu0 0.0
      %2052 = vmatpush1.msra.mxu0 %v2013
      %2053 = vmatprep.subr.mxu0 0.0
      %2054 = vmatpush1.msra.mxu0 %v2014
      %2055 = vmatprep.subr.mxu0 0.0
      %2056 = vmatpush1.msra.mxu0 0.0
      %2057 = vmatprep.subr.mxu0 0.0
      %2058 = vmatpush1.msra.mxu0 0.0
      %2059 = vmatprep.subr.mxu0 0.0
      %2060 = vmatpush1.msra.mxu0 0.0
      %2061 = vmatprep.subr.mxu0 0.0
      %2062 = vmatpush1.msra.mxu0 0.0
      %2063 = vmatprep.subr.mxu0 0.0
      %2064 = vmatpush1.msra.mxu0 0.0
      %2065 = vmatprep.subr.mxu0 0.0
      %2066 = vmatpush1.msra.mxu0 0.0
      %2067 = vmatprep.subr.mxu0 0.0
      %2068 = vmatpush1.msra.mxu0 0.0
      %2069 = vmatprep.subr.mxu0 0.0
      %2070 = vmatpush1.msra.mxu0 0.0
      %2071 = vmatprep.subr.mxu0 0.0
      %2072 = vmatpush1.msra.mxu0 0.0
      %2073 = vmatprep.subr.mxu0 0.0
      %2074 = vmatpush1.msra.mxu0 0.0
      %2075 = vmatprep.subr.mxu0 0.0
      %2076 = vmatpush1.msra.mxu0 0.0
      %2077 = vmatprep.subr.mxu0 0.0
      %2078 = vmatpush1.msra.mxu0 0.0
      %2079 = vmatprep.subr.mxu0 0.0
      %2080 = vmatpush1.msra.mxu0 0.0
      %2081 = vmatprep.subr.mxu0 0.0
      %2082 = vmatpush1.msra.mxu0 0.0
      %2083 = vmatprep.subr.mxu0 0.0
      %2084 = vmatpush1.msra.mxu0 0.0
      %2085 = vmatprep.subr.mxu0 0.0
      %2086 = vmatpush1.msra.mxu0 0.0
      %2087 = vmatprep.mubr.f32.mxu0 0.0
      %2088 = vmatmul.mubr.f32.gmra.mrb[0].mxu0 %v1982
      %v2089 = vpop.f32.mrb[0].mxu0
      %v2090 = vadd.f32 %v2021, %v2089
      %v2091 = vpop.f32.mrb[0].mxu0
      %2092 = vmatprep.mubr.f32.mxu0 0.0
      %2093 = vmatmul.mubr.f32.gmra.mrb[0].mxu0 %v1983
      %v2094 = vpop.f32.mrb[0].mxu0
      %v2095 = vadd.f32 %v2021, %v2094
      %v2096 = vpop.f32.mrb[0].mxu0
      %2097 = vmatprep.mubr.f32.mxu0 0.0
      %2098 = vmatmul.mubr.f32.gmra.mrb[0].mxu0 %v1984
      %v2099 = vpop.f32.mrb[0].mxu0
      %v2100 = vadd.f32 %v2021, %v2099
      %v2101 = vpop.f32.mrb[0].mxu0
      %2102 = vmatprep.mubr.f32.mxu0 0.0
      %2103 = vmatmul.mubr.f32.gmra.mrb[0].mxu0 %v1985
      %v2104 = vpop.f32.mrb[0].mxu0
      %v2105 = vadd.f32 %v2021, %v2104
      %v2106 = vpop.f32.mrb[0].mxu0
      %2107 = vmatprep.mubr.f32.mxu0 0.0
      %2108 = vmatmul.mubr.f32.gmra.mrb[0].mxu0 %v1986
      %v2109 = vpop.f32.mrb[0].mxu0
      %v2110 = vadd.f32 %v2021, %v2109
      %v2111 = vpop.f32.mrb[0].mxu0
      %2112 = vmatprep.mubr.f32.mxu0 0.0
      %2113 = vmatmul.mubr.f32.gmra.mrb[0].mxu0 %v1987
      %v2114 = vpop.f32.mrb[0].mxu0
      %v2115 = vadd.f32 %v2021, %v2114
      %v2116 = vpop.f32.mrb[0].mxu0
      %2117 = vmatprep.mubr.f32.mxu0 0.0
      %2118 = vmatmul.mubr.f32.gmra.mrb[0].mxu0 %v1988
      %v2119 = vpop.f32.mrb[0].mxu0
      %v2120 = vadd.f32 %v2021, %v2119
      %v2121 = vpop.f32.mrb[0].mxu0
      %2122 = vmatprep.mubr.f32.mxu0 0.0
      %2123 = vmatmul.mubr.f32.gmra.mrb[0].mxu0 %v1989
      %v2124 = vpop.f32.mrb[0].mxu0
      %v2125 = vadd.f32 %v2021, %v2124
      %v2126 = vpop.f32.mrb[0].mxu0
      %2127 = vmatprep.mubr.f32.mxu0 0.0
      %2128 = vmatmul.mubr.f32.gmra.mrb[0].mxu0 %v1990
      %v2129 = vpop.f32.mrb[0].mxu0
      %v2130 = vadd.f32 %v2021, %v2129
      %v2131 = vpop.f32.mrb[0].mxu0
      %2132 = vmatprep.mubr.f32.mxu0 0.0
      %2133 = vmatmul.mubr.f32.gmra.mrb[0].mxu0 %v1991
      %v2134 = vpop.f32.mrb[0].mxu0
      %v2135 = vadd.f32 %v2021, %v2134
      %v2136 = vpop.f32.mrb[0].mxu0
      %2137 = vmatprep.mubr.f32.mxu0 0.0
      %2138 = vmatmul.mubr.f32.gmra.mrb[0].mxu0 %v1992
      %v2139 = vpop.f32.mrb[0].mxu0
      %v2140 = vadd.f32 %v2021, %v2139
      %v2141 = vpop.f32.mrb[0].mxu0
      %2142 = vmatprep.mubr.f32.mxu0 0.0
      %2143 = vmatmul.mubr.f32.gmra.mrb[0].mxu0 %v1993
      %v2144 = vpop.f32.mrb[0].mxu0
      %v2145 = vadd.f32 %v2021, %v2144
      %v2146 = vpop.f32.mrb[0].mxu0
      %2147 = vmatprep.mubr.f32.mxu0 0.0
      %2148 = vmatmul.mubr.f32.gmra.mrb[0].mxu0 %v1994
      %v2149 = vpop.f32.mrb[0].mxu0
      %v2150 = vadd.f32 %v2021, %v2149
      %v2151 = vpop.f32.mrb[0].mxu0
      %2152 = vmatprep.mubr.f32.mxu0 0.0
      %2153 = vmatmul.mubr.f32.gmra.mrb[0].mxu0 %v1995
      %v2154 = vpop.f32.mrb[0].mxu0
      %v2155 = vadd.f32 %v2021, %v2154
      %v2156 = vpop.f32.mrb[0].mxu0
      %2157 = vmatprep.mubr.f32.mxu0 0.0
      %2158 = vmatmul.mubr.f32.gmra.mrb[0].mxu0 %v1996
      %v2159 = vpop.f32.mrb[0].mxu0
      %v2160 = vadd.f32 %v2021, %v2159
      %v2161 = vpop.f32.mrb[0].mxu0
      %2162 = vmatprep.mubr.f32.mxu0 0.0
      %2163 = vmatmul.mubr.f32.gmra.mrb[0].mxu0 %v1997
      %v2164 = vpop.f32.mrb[0].mxu0
      %v2165 = vadd.f32 %v2021, %v2164
      %v2166 = vpop.f32.mrb[0].mxu0
      %2167 = vdwg.mxu0
      %v2168 = vmax.f32 %v2090, 0.0
      %v2169 = vmax.f32 %v2095, 0.0
      %v2170 = vmax.f32 %v2100, 0.0
      %v2171 = vmax.f32 %v2105, 0.0
      %v2172 = vmax.f32 %v2110, 0.0
      %v2173 = vmax.f32 %v2115, 0.0
      %v2174 = vmax.f32 %v2120, 0.0
      %v2175 = vmax.f32 %v2125, 0.0
      %v2176 = vmax.f32 %v2130, 0.0
      %v2177 = vmax.f32 %v2135, 0.0
      %v2178 = vmax.f32 %v2140, 0.0
      %v2179 = vmax.f32 %v2145, 0.0
      %v2180 = vmax.f32 %v2150, 0.0
      %v2181 = vmax.f32 %v2155, 0.0
      %v2182 = vmax.f32 %v2160, 0.0
      %v2183 = vmax.f32 %v2165, 0.0
      %v2184 = vand.u32 2147483647, %v2090
      %v2185 = vand.u32 2147483647, %v2095
      %v2186 = vand.u32 2147483647, %v2100
      %v2187 = vand.u32 2147483647, %v2105
      %v2188 = vand.u32 2147483647, %v2110
      %v2189 = vand.u32 2147483647, %v2115
      %v2190 = vand.u32 2147483647, %v2120
      %v2191 = vand.u32 2147483647, %v2125
      %v2192 = vand.u32 2147483647, %v2130
      %v2193 = vand.u32 2147483647, %v2135
      %v2194 = vand.u32 2147483647, %v2140
      %v2195 = vand.u32 2147483647, %v2145
      %v2196 = vand.u32 2147483647, %v2150
      %v2197 = vand.u32 2147483647, %v2155
      %v2198 = vand.u32 2147483647, %v2160
      %v2199 = vand.u32 2147483647, %v2165
      %v2200 = vsub.f32 0.0, %v2184
      %v2201 = vsub.f32 0.0, %v2185
      %v2202 = vsub.f32 0.0, %v2186
      %v2203 = vsub.f32 0.0, %v2187
      %v2204 = vsub.f32 0.0, %v2188
      %v2205 = vsub.f32 0.0, %v2189
      %v2206 = vsub.f32 0.0, %v2190
      %v2207 = vsub.f32 0.0, %v2191
      %v2208 = vsub.f32 0.0, %v2192
      %v2209 = vsub.f32 0.0, %v2193
      %v2210 = vsub.f32 0.0, %v2194
      %v2211 = vsub.f32 0.0, %v2195
      %v2212 = vsub.f32 0.0, %v2196
      %v2213 = vsub.f32 0.0, %v2197
      %v2214 = vsub.f32 0.0, %v2198
      %v2215 = vsub.f32 0.0, %v2199
      %v2216 = vmul.f32 %v2200, 1.442695
      %v2217 = vpow.pop %v2216
      %v2218 = vmul.f32 %v2201, 1.442695
      %v2219 = vpow.pop %v2218
      %v2220 = vmul.f32 %v2202, 1.442695
      %v2221 = vpow.pop %v2220
      %v2222 = vmul.f32 %v2203, 1.442695
      %v2223 = vpow.pop %v2222
      %v2224 = vmul.f32 %v2204, 1.442695
      %v2225 = vpow.pop %v2224
      %v2226 = vmul.f32 %v2205, 1.442695
      %v2227 = vpow.pop %v2226
      %v2228 = vmul.f32 %v2206, 1.442695
      %v2229 = vpow.pop %v2228
      %v2230 = vmul.f32 %v2207, 1.442695
      %v2231 = vpow.pop %v2230
      %v2232 = vmul.f32 %v2208, 1.442695
      %v2233 = vpow.pop %v2232
      %v2234 = vmul.f32 %v2209, 1.442695
      %v2235 = vpow.pop %v2234
      %v2236 = vmul.f32 %v2210, 1.442695
      %v2237 = vpow.pop %v2236
      %v2238 = vmul.f32 %v2211, 1.442695
      %v2239 = vpow.pop %v2238
      %v2240 = vmul.f32 %v2212, 1.442695
      %v2241 = vpow.pop %v2240
      %v2242 = vmul.f32 %v2213, 1.442695
      %v2243 = vpow.pop %v2242
      %v2244 = vmul.f32 %v2214, 1.442695
      %v2245 = vpow.pop %v2244
      %v2246 = vmul.f32 %v2215, 1.442695
      %v2247 = vpow.pop %v2246
      %v2248 = vadd.f32 %v2217, 1.0
      %v2249 = vlog2.pop %v2248
      %v2250 = vmul.f32 %v2249, 0.6931472
      %v2251 = vmul.f32 -0.5, %v2217
      %v2252 = vadd.f32 %v2251, 1.0
      %v2253 = vmul.f32 %v2252, %v2217
      %v2254 = vand.u32 2147483647, %v2217
      %vm2255 = vcmp.lt.f32.partialorder %v2254, 0.0004427343
      %v2256 = vsel %vm2255, %v2253, %v2250
      %v2257 = vadd.f32 %v2219, 1.0
      %v2258 = vlog2.pop %v2257
      %v2259 = vmul.f32 %v2258, 0.6931472
      %v2260 = vmul.f32 -0.5, %v2219
      %v2261 = vadd.f32 %v2260, 1.0
      %v2262 = vmul.f32 %v2261, %v2219
      %v2263 = vand.u32 2147483647, %v2219
      %vm2264 = vcmp.lt.f32.partialorder %v2263, 0.0004427343
      %v2265 = vsel %vm2264, %v2262, %v2259
      %v2266 = vadd.f32 %v2221, 1.0
      %v2267 = vlog2.pop %v2266
      %v2268 = vmul.f32 %v2267, 0.6931472
      %v2269 = vmul.f32 -0.5, %v2221
      %v2270 = vadd.f32 %v2269, 1.0
      %v2271 = vmul.f32 %v2270, %v2221
      %v2272 = vand.u32 2147483647, %v2221
      %vm2273 = vcmp.lt.f32.partialorder %v2272, 0.0004427343
      %v2274 = vsel %vm2273, %v2271, %v2268
      %v2275 = vadd.f32 %v2223, 1.0
      %v2276 = vlog2.pop %v2275
      %v2277 = vmul.f32 %v2276, 0.6931472
      %v2278 = vmul.f32 -0.5, %v2223
      %v2279 = vadd.f32 %v2278, 1.0
      %v2280 = vmul.f32 %v2279, %v2223
      %v2281 = vand.u32 2147483647, %v2223
      %vm2282 = vcmp.lt.f32.partialorder %v2281, 0.0004427343
      %v2283 = vsel %vm2282, %v2280, %v2277
      %v2284 = vadd.f32 %v2225, 1.0
      %v2285 = vlog2.pop %v2284
      %v2286 = vmul.f32 %v2285, 0.6931472
      %v2287 = vmul.f32 -0.5, %v2225
      %v2288 = vadd.f32 %v2287, 1.0
      %v2289 = vmul.f32 %v2288, %v2225
      %v2290 = vand.u32 2147483647, %v2225
      %vm2291 = vcmp.lt.f32.partialorder %v2290, 0.0004427343
      %v2292 = vsel %vm2291, %v2289, %v2286
      %v2293 = vadd.f32 %v2227, 1.0
      %v2294 = vlog2.pop %v2293
      %v2295 = vmul.f32 %v2294, 0.6931472
      %v2296 = vmul.f32 -0.5, %v2227
      %v2297 = vadd.f32 %v2296, 1.0
      %v2298 = vmul.f32 %v2297, %v2227
      %v2299 = vand.u32 2147483647, %v2227
      %vm2300 = vcmp.lt.f32.partialorder %v2299, 0.0004427343
      %v2301 = vsel %vm2300, %v2298, %v2295
      %v2302 = vadd.f32 %v2229, 1.0
      %v2303 = vlog2.pop %v2302
      %v2304 = vmul.f32 %v2303, 0.6931472
      %v2305 = vmul.f32 -0.5, %v2229
      %v2306 = vadd.f32 %v2305, 1.0
      %v2307 = vmul.f32 %v2306, %v2229
      %v2308 = vand.u32 2147483647, %v2229
      %vm2309 = vcmp.lt.f32.partialorder %v2308, 0.0004427343
      %v2310 = vsel %vm2309, %v2307, %v2304
      %v2311 = vadd.f32 %v2231, 1.0
      %v2312 = vlog2.pop %v2311
      %v2313 = vmul.f32 %v2312, 0.6931472
      %v2314 = vmul.f32 -0.5, %v2231
      %v2315 = vadd.f32 %v2314, 1.0
      %v2316 = vmul.f32 %v2315, %v2231
      %v2317 = vand.u32 2147483647, %v2231
      %vm2318 = vcmp.lt.f32.partialorder %v2317, 0.0004427343
      %v2319 = vsel %vm2318, %v2316, %v2313
      %v2320 = vadd.f32 %v2233, 1.0
      %v2321 = vlog2.pop %v2320
      %v2322 = vmul.f32 %v2321, 0.6931472
      %v2323 = vmul.f32 -0.5, %v2233
      %v2324 = vadd.f32 %v2323, 1.0
      %v2325 = vmul.f32 %v2324, %v2233
      %v2326 = vand.u32 2147483647, %v2233
      %vm2327 = vcmp.lt.f32.partialorder %v2326, 0.0004427343
      %v2328 = vsel %vm2327, %v2325, %v2322
      %v2329 = vadd.f32 %v2235, 1.0
      %v2330 = vlog2.pop %v2329
      %v2331 = vmul.f32 %v2330, 0.6931472
      %v2332 = vmul.f32 -0.5, %v2235
      %v2333 = vadd.f32 %v2332, 1.0
      %v2334 = vmul.f32 %v2333, %v2235
      %v2335 = vand.u32 2147483647, %v2235
      %vm2336 = vcmp.lt.f32.partialorder %v2335, 0.0004427343
      %v2337 = vsel %vm2336, %v2334, %v2331
      %v2338 = vadd.f32 %v2237, 1.0
      %v2339 = vlog2.pop %v2338
      %v2340 = vmul.f32 %v2339, 0.6931472
      %v2341 = vmul.f32 -0.5, %v2237
      %v2342 = vadd.f32 %v2341, 1.0
      %v2343 = vmul.f32 %v2342, %v2237
      %v2344 = vand.u32 2147483647, %v2237
      %vm2345 = vcmp.lt.f32.partialorder %v2344, 0.0004427343
      %v2346 = vsel %vm2345, %v2343, %v2340
      %v2347 = vadd.f32 %v2239, 1.0
      %v2348 = vlog2.pop %v2347
      %v2349 = vmul.f32 %v2348, 0.6931472
      %v2350 = vmul.f32 -0.5, %v2239
      %v2351 = vadd.f32 %v2350, 1.0
      %v2352 = vmul.f32 %v2351, %v2239
      %v2353 = vand.u32 2147483647, %v2239
      %vm2354 = vcmp.lt.f32.partialorder %v2353, 0.0004427343
      %v2355 = vsel %vm2354, %v2352, %v2349
      %v2356 = vadd.f32 %v2241, 1.0
      %v2357 = vlog2.pop %v2356
      %v2358 = vmul.f32 %v2357, 0.6931472
      %v2359 = vmul.f32 -0.5, %v2241
      %v2360 = vadd.f32 %v2359, 1.0
      %v2361 = vmul.f32 %v2360, %v2241
      %v2362 = vand.u32 2147483647, %v2241
      %vm2363 = vcmp.lt.f32.partialorder %v2362, 0.0004427343
      %v2364 = vsel %vm2363, %v2361, %v2358
      %v2365 = vadd.f32 %v2243, 1.0
      %v2366 = vlog2.pop %v2365
      %v2367 = vmul.f32 %v2366, 0.6931472
      %v2368 = vmul.f32 -0.5, %v2243
      %v2369 = vadd.f32 %v2368, 1.0
      %v2370 = vmul.f32 %v2369, %v2243
      %v2371 = vand.u32 2147483647, %v2243
      %vm2372 = vcmp.lt.f32.partialorder %v2371, 0.0004427343
      %v2373 = vsel %vm2372, %v2370, %v2367
      %v2374 = vadd.f32 %v2245, 1.0
      %v2375 = vlog2.pop %v2374
      %v2376 = vmul.f32 %v2375, 0.6931472
      %v2377 = vmul.f32 -0.5, %v2245
      %v2378 = vadd.f32 %v2377, 1.0
      %v2379 = vmul.f32 %v2378, %v2245
      %v2380 = vand.u32 2147483647, %v2245
      %vm2381 = vcmp.lt.f32.partialorder %v2380, 0.0004427343
      %v2382 = vsel %vm2381, %v2379, %v2376
      %v2383 = vadd.f32 %v2247, 1.0
      %v2384 = vlog2.pop %v2383
      %v2385 = vmul.f32 %v2384, 0.6931472
      %v2386 = vmul.f32 -0.5, %v2247
      %v2387 = vadd.f32 %v2386, 1.0
      %v2388 = vmul.f32 %v2387, %v2247
      %v2389 = vand.u32 2147483647, %v2247
      %vm2390 = vcmp.lt.f32.partialorder %v2389, 0.0004427343
      %v2391 = vsel %vm2390, %v2388, %v2385
      %v2392 = vadd.f32 %v2168, %v2256
      %v2393 = vadd.f32 %v2169, %v2265
      %v2394 = vadd.f32 %v2170, %v2274
      %v2395 = vadd.f32 %v2171, %v2283
      %v2396 = vadd.f32 %v2172, %v2292
      %v2397 = vadd.f32 %v2173, %v2301
      %v2398 = vadd.f32 %v2174, %v2310
      %v2399 = vadd.f32 %v2175, %v2319
      %v2400 = vadd.f32 %v2176, %v2328
      %v2401 = vadd.f32 %v2177, %v2337
      %v2402 = vadd.f32 %v2178, %v2346
      %v2403 = vadd.f32 %v2179, %v2355
      %v2404 = vadd.f32 %v2180, %v2364
      %v2405 = vadd.f32 %v2181, %v2373
      %v2406 = vadd.f32 %v2182, %v2382
      %v2407 = vadd.f32 %v2183, %v2391
      %s2408 = scalar_lea.vmem %s1, 768
      %v2409 = vld [vmem:[%s2408] sm:$0xff]
      %v2410 = vld [vmem:[%s2408 + $0x8] sm:$0xff]
      %v2411 = vld [vmem:[%s2408 + $0x10] sm:$0xff]
      %v2412 = vld [vmem:[%s2408 + $0x18] sm:$0xff]
      %v2413 = vld [vmem:[%s2408 + $0x20] sm:$0xff]
      %v2414 = vld [vmem:[%s2408 + $0x28] sm:$0xff]
      %v2415 = vld [vmem:[%s2408 + $0x30] sm:$0xff]
      %v2416 = vld [vmem:[%s2408 + $0x38] sm:$0xff]
      %v2417 = vld [vmem:[%s2408 + $0x40] sm:$0xff]
      %v2418 = vld [vmem:[%s2408 + $0x48] sm:$0xff]
      %v2419 = vld [vmem:[%s2408 + $0x50] sm:$0xff]
      %v2420 = vld [vmem:[%s2408 + $0x58] sm:$0xff]
      %v2421 = vld [vmem:[%s2408 + $0x60] sm:$0xff]
      %v2422 = vld [vmem:[%s2408 + $0x68] sm:$0xff]
      %v2423 = vld [vmem:[%s2408 + $0x70] sm:$0xff]
      %v2424 = vld [vmem:[%s2408 + $0x78] sm:$0xff]
      %s2425 = scalar_lea.vmem %s2, 6
      %v2426 = vld [vmem:[%s2425] sm:$0x1]
      %v2428 = vlaneseq
      %v2429 = vshrl.u32 %v2428, 7
      %v2430 = vsub.s32 0, %v2429
      %v2431 = vrot.slane %v2426, %v2430
      %2433 = vmatprep.subr.mxu0 0.0
      %2434 = vmatpush1.msra.mxu0 %v2409
      %2435 = vmatprep.subr.mxu0 0.0
      %2436 = vmatpush1.msra.mxu0 %v2410
      %2437 = vmatprep.subr.mxu0 0.0
      %2438 = vmatpush1.msra.mxu0 %v2411
      %2439 = vmatprep.subr.mxu0 0.0
      %2440 = vmatpush1.msra.mxu0 %v2412
      %2441 = vmatprep.subr.mxu0 0.0
      %2442 = vmatpush1.msra.mxu0 %v2413
      %2443 = vmatprep.subr.mxu0 0.0
      %2444 = vmatpush1.msra.mxu0 %v2414
      %2445 = vmatprep.subr.mxu0 0.0
      %2446 = vmatpush1.msra.mxu0 %v2415
      %2447 = vmatprep.subr.mxu0 0.0
      %2448 = vmatpush1.msra.mxu0 %v2416
      %2449 = vmatprep.subr.mxu0 0.0
      %2450 = vmatpush1.msra.mxu0 %v2417
      %2451 = vmatprep.subr.mxu0 0.0
      %2452 = vmatpush1.msra.mxu0 %v2418
      %2453 = vmatprep.subr.mxu0 0.0
      %2454 = vmatpush1.msra.mxu0 %v2419
      %2455 = vmatprep.subr.mxu0 0.0
      %2456 = vmatpush1.msra.mxu0 %v2420
      %2457 = vmatprep.subr.mxu0 0.0
      %2458 = vmatpush1.msra.mxu0 %v2421
      %2459 = vmatprep.subr.mxu0 0.0
      %2460 = vmatpush1.msra.mxu0 %v2422
      %2461 = vmatprep.subr.mxu0 0.0
      %2462 = vmatpush1.msra.mxu0 %v2423
      %2463 = vmatprep.subr.mxu0 0.0
      %2464 = vmatpush1.msra.mxu0 %v2424
      %2465 = vmatprep.subr.mxu0 0.0
      %2466 = vmatpush1.msra.mxu0 0.0
      %2467 = vmatprep.subr.mxu0 0.0
      %2468 = vmatpush1.msra.mxu0 0.0
      %2469 = vmatprep.subr.mxu0 0.0
      %2470 = vmatpush1.msra.mxu0 0.0
      %2471 = vmatprep.subr.mxu0 0.0
      %2472 = vmatpush1.msra.mxu0 0.0
      %2473 = vmatprep.subr.mxu0 0.0
      %2474 = vmatpush1.msra.mxu0 0.0
      %2475 = vmatprep.subr.mxu0 0.0
      %2476 = vmatpush1.msra.mxu0 0.0
      %2477 = vmatprep.subr.mxu0 0.0
      %2478 = vmatpush1.msra.mxu0 0.0
      %2479 = vmatprep.subr.mxu0 0.0
      %2480 = vmatpush1.msra.mxu0 0.0
      %2481 = vmatprep.subr.mxu0 0.0
      %2482 = vmatpush1.msra.mxu0 0.0
      %2483 = vmatprep.subr.mxu0 0.0
      %2484 = vmatpush1.msra.mxu0 0.0
      %2485 = vmatprep.subr.mxu0 0.0
      %2486 = vmatpush1.msra.mxu0 0.0
      %2487 = vmatprep.subr.mxu0 0.0
      %2488 = vmatpush1.msra.mxu0 0.0
      %2489 = vmatprep.subr.mxu0 0.0
      %2490 = vmatpush1.msra.mxu0 0.0
      %2491 = vmatprep.subr.mxu0 0.0
      %2492 = vmatpush1.msra.mxu0 0.0
      %2493 = vmatprep.subr.mxu0 0.0
      %2494 = vmatpush1.msra.mxu0 0.0
      %2495 = vmatprep.subr.mxu0 0.0
      %2496 = vmatpush1.msra.mxu0 0.0
      %2497 = vmatprep.mubr.f32.mxu0 0.0
      %2498 = vmatmul.mubr.f32.gmra.mrb[0].mxu0 %v2392
      %v2499 = vpop.f32.mrb[0].mxu0
      %v2500 = vadd.f32 %v2431, %v2499
      %v2501 = vpop.f32.mrb[0].mxu0
      %2502 = vmatprep.mubr.f32.mxu0 0.0
      %2503 = vmatmul.mubr.f32.gmra.mrb[0].mxu0 %v2393
      %v2504 = vpop.f32.mrb[0].mxu0
      %v2505 = vadd.f32 %v2431, %v2504
      %v2506 = vpop.f32.mrb[0].mxu0
      %2507 = vmatprep.mubr.f32.mxu0 0.0
      %2508 = vmatmul.mubr.f32.gmra.mrb[0].mxu0 %v2394
      %v2509 = vpop.f32.mrb[0].mxu0
      %v2510 = vadd.f32 %v2431, %v2509
      %v2511 = vpop.f32.mrb[0].mxu0
      %2512 = vmatprep.mubr.f32.mxu0 0.0
      %2513 = vmatmul.mubr.f32.gmra.mrb[0].mxu0 %v2395
      %v2514 = vpop.f32.mrb[0].mxu0
      %v2515 = vadd.f32 %v2431, %v2514
      %v2516 = vpop.f32.mrb[0].mxu0
      %2517 = vmatprep.mubr.f32.mxu0 0.0
      %2518 = vmatmul.mubr.f32.gmra.mrb[0].mxu0 %v2396
      %v2519 = vpop.f32.mrb[0].mxu0
      %v2520 = vadd.f32 %v2431, %v2519
      %v2521 = vpop.f32.mrb[0].mxu0
      %2522 = vmatprep.mubr.f32.mxu0 0.0
      %2523 = vmatmul.mubr.f32.gmra.mrb[0].mxu0 %v2397
      %v2524 = vpop.f32.mrb[0].mxu0
      %v2525 = vadd.f32 %v2431, %v2524
      %v2526 = vpop.f32.mrb[0].mxu0
      %2527 = vmatprep.mubr.f32.mxu0 0.0
      %2528 = vmatmul.mubr.f32.gmra.mrb[0].mxu0 %v2398
      %v2529 = vpop.f32.mrb[0].mxu0
      %v2530 = vadd.f32 %v2431, %v2529
      %v2531 = vpop.f32.mrb[0].mxu0
      %2532 = vmatprep.mubr.f32.mxu0 0.0
      %2533 = vmatmul.mubr.f32.gmra.mrb[0].mxu0 %v2399
      %v2534 = vpop.f32.mrb[0].mxu0
      %v2535 = vadd.f32 %v2431, %v2534
      %v2536 = vpop.f32.mrb[0].mxu0
      %2537 = vmatprep.mubr.f32.mxu0 0.0
      %2538 = vmatmul.mubr.f32.gmra.mrb[0].mxu0 %v2400
      %v2539 = vpop.f32.mrb[0].mxu0
      %v2540 = vadd.f32 %v2431, %v2539
      %v2541 = vpop.f32.mrb[0].mxu0
      %2542 = vmatprep.mubr.f32.mxu0 0.0
      %2543 = vmatmul.mubr.f32.gmra.mrb[0].mxu0 %v2401
      %v2544 = vpop.f32.mrb[0].mxu0
      %v2545 = vadd.f32 %v2431, %v2544
      %v2546 = vpop.f32.mrb[0].mxu0
      %2547 = vmatprep.mubr.f32.mxu0 0.0
      %2548 = vmatmul.mubr.f32.gmra.mrb[0].mxu0 %v2402
      %v2549 = vpop.f32.mrb[0].mxu0
      %v2550 = vadd.f32 %v2431, %v2549
      %v2551 = vpop.f32.mrb[0].mxu0
      %2552 = vmatprep.mubr.f32.mxu0 0.0
      %2553 = vmatmul.mubr.f32.gmra.mrb[0].mxu0 %v2403
      %v2554 = vpop.f32.mrb[0].mxu0
      %v2555 = vadd.f32 %v2431, %v2554
      %v2556 = vpop.f32.mrb[0].mxu0
      %2557 = vmatprep.mubr.f32.mxu0 0.0
      %2558 = vmatmul.mubr.f32.gmra.mrb[0].mxu0 %v2404
      %v2559 = vpop.f32.mrb[0].mxu0
      %v2560 = vadd.f32 %v2431, %v2559
      %v2561 = vpop.f32.mrb[0].mxu0
      %2562 = vmatprep.mubr.f32.mxu0 0.0
      %2563 = vmatmul.mubr.f32.gmra.mrb[0].mxu0 %v2405
      %v2564 = vpop.f32.mrb[0].mxu0
      %v2565 = vadd.f32 %v2431, %v2564
      %v2566 = vpop.f32.mrb[0].mxu0
      %2567 = vmatprep.mubr.f32.mxu0 0.0
      %2568 = vmatmul.mubr.f32.gmra.mrb[0].mxu0 %v2406
      %v2569 = vpop.f32.mrb[0].mxu0
      %v2570 = vadd.f32 %v2431, %v2569
      %v2571 = vpop.f32.mrb[0].mxu0
      %2572 = vmatprep.mubr.f32.mxu0 0.0
      %2573 = vmatmul.mubr.f32.gmra.mrb[0].mxu0 %v2407
      %v2574 = vpop.f32.mrb[0].mxu0
      %v2575 = vadd.f32 %v2431, %v2574
      %v2576 = vpop.f32.mrb[0].mxu0
      %2577 = vdwg.mxu0
      %2578 = vst [vmem:[%s172] sm:$0xff] %v2500
      %2579 = vst [vmem:[%s172 + $0x8] sm:$0xff] %v2505
      %2580 = vst [vmem:[%s172 + $0x10] sm:$0xff] %v2510
      %2581 = vst [vmem:[%s172 + $0x18] sm:$0xff] %v2515
      %2582 = vst [vmem:[%s172 + $0x20] sm:$0xff] %v2520
      %2583 = vst [vmem:[%s172 + $0x28] sm:$0xff] %v2525
      %2584 = vst [vmem:[%s172 + $0x30] sm:$0xff] %v2530
      %2585 = vst [vmem:[%s172 + $0x38] sm:$0xff] %v2535
      %2586 = vst [vmem:[%s172 + $0x40] sm:$0xff] %v2540
      %2587 = vst [vmem:[%s172 + $0x48] sm:$0xff] %v2545
      %2588 = vst [vmem:[%s172 + $0x50] sm:$0xff] %v2550
      %2589 = vst [vmem:[%s172 + $0x58] sm:$0xff] %v2555
      %2590 = vst [vmem:[%s172 + $0x60] sm:$0xff] %v2560
      %2591 = vst [vmem:[%s172 + $0x68] sm:$0xff] %v2565
      %2592 = vst [vmem:[%s172 + $0x70] sm:$0xff] %v2570
      %2593 = vst [vmem:[%s172 + $0x78] sm:$0xff] %v2575
      %s2594 = smul.u32 16, %s14
      %p2595 = scmp.lt.s32.totalorder %s2594, 31
      %s2596 = scalar_select %p2595, %s2594, 31
      %s2597 = smul.addr %s2596, 8
      %s2598 = scalar_lea.vmem %s3, %s2597
      // Predicated region
      $region33: #{neuralnet_forward.1} parent=31 // pred_check
        %p2599 = pneg %p100
      $region34: #{neuralnet_forward.1} parent=31 // pred_check_branch
        %2601 = sbr.rel (%p2599) target = $region36
      $region35: #{neuralnet_forward.1} parent=31 // pred_region
        %s2602 = smul.u32 16, %s14
      $region36: #{neuralnet_forward.1} parent=31 // pred_fallthru
        _
    $region32: #{neuralnet_forward.1} parent=5 // pred_fallthru
      _
    %p2603 = scmp.le.s32.totalorder 2, %s9
    // Predicated region
    $region37: #{neuralnet_forward.1} parent=5 // pred_check
      %p2604 = pneg %p2603
    $region38: #{neuralnet_forward.1} parent=5 // pred_check_branch
      %2606 = sbr.rel (%p2604) target = $region40
    $region39: #{neuralnet_forward.1} parent=5 // pred_region
      %s2607 = ssub.s32 %s9, 2
      // Predicated region
      $region41: #{neuralnet_forward.1} parent=39 // pred_check
        %p2608 = pneg %p106
      $region42: #{neuralnet_forward.1} parent=39 // pred_check_branch
        %2610 = sbr.rel (%p2608) target = $region44
      $region43: #{neuralnet_forward.1} parent=39 // pred_region
        %s2611 = smul.u32 16, %s15
        %p2612 = scmp.lt.s32.totalorder %s2611, 31
        %s2613 = scalar_select %p2612, %s2611, 31
        %s2614 = smul.addr %s2613, 8
        %s2615 = scalar_lea.vmem %s3, %s2614
      $region44: #{neuralnet_forward.1} parent=39 // pred_fallthru
        _
    $region40: #{neuralnet_forward.1} parent=5 // pred_fallthru
      _
  $region6: #{neuralnet_forward.1} parent=0 // loop_footer
    %s13 = sadd.s32 1, %s9
  $region7: #{neuralnet_forward.1} parent=0 // loop_footer_branch
    %8 = sbr.rel target = $region3
  $region8: #{neuralnet_forward.1} parent=0 // loop_exit
    _

</llo_original>
